<compile_context>
chip_gen: v7x
topology: tpu7x:2x2x1
jax: 0.10.0
libtpu: 0.0.40
codegen_flags: <defaults>
</compile_context>

<pallas_src>
import functools

import jax
import jax.numpy as jnp
from jax import lax
from jax.experimental import pallas as pl
from jax.experimental.pallas import tpu as pltpu

NEG_SLOPE = -3.2710059
LANE = 128
STRIDE = 2
PAD = 2
KSIZE = 8
SUB = KSIZE // STRIDE          # per-parity sub-kernel size = 4


def _round_up(x, m):
    return ((x + m - 1) // m) * m


def _fused_conv_kernel(x_ref, w_ref, o_ref, *, row_stride, mp):
    # x_ref: (Cin_pad, Lp)   flattened 2-padded input (row stride = row_stride)
    # w_ref: (NP, 16*Cin_pad) packed parity weights, columns ordered (t, u, ci)
    # o_ref: (NP, mp)        parity outputs, flat with row stride = row_stride
    xv = x_ref[...]
    # In-VMEM im2col: each (t, u) kernel offset is a shifted slice of the flat
    # padded input.  Static offsets -> cheap lane shifts; no HBM round trip.
    cols = jnp.concatenate(
        [xv[:, t * row_stride + u: t * row_stride + u + mp]
         for t in range(SUB) for u in range(SUB)],
        axis=0)                                            # (16*Cin_pad, mp)
    acc = jnp.dot(w_ref[...], cols,
                  preferred_element_type=jnp.float32,
                  precision=jax.lax.Precision.HIGHEST)
    o_ref[...] = jnp.where(acc > 0, acc, acc * NEG_SLOPE)


@jax.jit
def conv_transpose_leaky(x, weight):
    """x: (1, Cin, H, W) f32; weight: (Cin, Cout, K, K) f32 (PyTorch layout)."""
    N, Cin, H, W = x.shape
    _, Cout, K, _ = weight.shape
    assert N == 1 and K == KSIZE

    Ho = (H - 1) * STRIDE - 2 * PAD + K          # = 2H + 2  (even)
    Wo = (W - 1) * STRIDE - 2 * PAD + K          # = 2W + 2  (even)
    Ha, Wb = Ho // STRIDE, Wo // STRIDE          # per-parity output = H+1, W+1
    Wrow = W + 2 * PAD                           # padded-input row stride
    Cin_pad = _round_up(Cin, 8)                  # 7 -> 8 sublanes
    NP = _round_up(4 * Cout, 8)                  # 12 -> 16 output rows
    KP = SUB * SUB * Cin_pad                     # 128 contraction (1 MXU pass)

    # ---- flattened, 2-padded input (Cin_pad, Lp) ---------------------------
    # out[co, 2a+p, 2b+q] = sum_{ci,t,u} x_p[ci, a+t, b+u]
    #                                     * weight[ci, co, 6-2t+p, 6-2u+q]
    x_p = jnp.pad(x[0], ((0, Cin_pad - Cin), (PAD, PAD), (PAD, PAD)))
    Lraw = (H + 2 * PAD) * Wrow
    M2 = Ha * Wrow                               # flat output cols (incl. junk band)
    Mp = _round_up(M2, LANE)                     # lane-dense output width
    max_shift = (SUB - 1) * Wrow + (SUB - 1)
    Lp = _round_up(max(Lraw, Mp + max_shift), LANE)
    x_flat = jnp.pad(x_p.reshape(Cin_pad, Lraw), ((0, 0), (0, Lp - Lraw)))

    # ---- packed parity weights (NP, KP), columns ordered (t, u, ci) --------
    wt = weight.transpose(1, 0, 2, 3)                              # (Cout, Cin, K, K)
    w_par = jnp.stack(
        [wt[:, :, p::2, q::2][:, :, ::-1, ::-1]                    # (Cout, Cin, 4, 4)
         for p in range(2) for q in range(2)], axis=0)             # (4, Cout, Cin, 4, 4)
    w_k = w_par.transpose(0, 1, 3, 4, 2)                           # (4, Cout, t, u, ci)
    w_k = jnp.pad(w_k, ((0, 0),) * 4 + ((0, Cin_pad - Cin),))
    w_k = w_k.reshape(4 * Cout, KP)
    w_k = jnp.pad(w_k, ((0, NP - 4 * Cout), (0, 0)))               # (NP, KP)

    # ---- single-dispatch fused kernel: im2col + GEMM + leaky select --------
    # Problem fits comfortably in VMEM on v5e/v6e/v7x for realistic sizes
    # (e.g. 87x109 input -> ~2 MiB total), so no grid / lane tiling is used.
    y = pl.pallas_call(
        functools.partial(_fused_conv_kernel, row_stride=Wrow, mp=Mp),
        out_shape=jax.ShapeDtypeStruct((NP, Mp), jnp.float32),
        in_specs=[pl.BlockSpec(memory_space=pltpu.MemorySpace.VMEM),
                  pl.BlockSpec(memory_space=pltpu.MemorySpace.VMEM)],
        out_specs=pl.BlockSpec(memory_space=pltpu.MemorySpace.VMEM),
    )(x_flat, w_k)

    # ---- drop junk/padded columns, de-interleave parity planes -------------
    y = y[:4 * Cout, :M2].reshape(2, 2, Cout, Ha, Wrow)[..., :Wb]  # [p, q, co, a, b]
    out = y.transpose(2, 3, 0, 4, 1).reshape(Cout, Ho, Wo)         # [co, 2a+p, 2b+q]
    return out[None]


def reference(x, weight):
    """Pure-JAX reference (conv_transpose via lhs_dilation) + leaky select."""
    Cin, Cout, K, _ = weight.shape
    w_flip = jnp.flip(weight, (2, 3)).transpose(1, 0, 2, 3)        # OIHW
    y = lax.conv_general_dilated(
        x, w_flip, window_strides=(1, 1),
        padding=[(K - 1 - PAD, K - 1 - PAD)] * 2,
        lhs_dilation=(STRIDE, STRIDE),
        dimension_numbers=('NCHW', 'OIHW', 'NCHW'),
        precision=jax.lax.Precision.HIGHEST)
    return jnp.where(y > 0, y, y * NEG_SLOPE)


if __name__ == "__main__":
    key = jax.random.PRNGKey(0)
    kx, kw = jax.random.split(key)

    # Small shapes consistent with the module: Cin=7, Cout=3, K=8, spatial=16.
    x = jax.random.normal(kx, (1, 7, 16, 16), dtype=jnp.float32)
    # PyTorch ConvTranspose2d weight layout: (in_channels, out_channels, kH, kW)
    weight = 0.05 * jax.random.normal(kw, (7, 3, 8, 8), dtype=jnp.float32)

    out = jax.block_until_ready(conv_transpose_leaky(x, weight))
    ref = jax.block_until_ready(reference(x, weight))

    assert out.shape == (1, 3, 34, 34), out.shape
    assert jnp.allclose(out, ref, rtol=1e-4, atol=1e-4), (
        float(jnp.max(jnp.abs(out - ref))))

    print("KERNEL_OK")
</pallas_src>

<mosaic_0001>
module attributes {stable_mosaic.version = 11 : i64} {
  func.func @_fused_conv_kernel(%arg0: memref<8x512xf32, #tpu.memory_space<vmem>>, %arg1: memref<16x128xf32, #tpu.memory_space<vmem>>, %arg2: memref<16x384xf32, #tpu.memory_space<vmem>>) attributes {dimension_semantics = [], scalar_prefetch = 0 : i64, scratch_operands = 0 : i64, tpu.core_type = #tpu.core_type<tc>} {
    %c0 = arith.constant 0 : index
    %c0_0 = arith.constant 0 : index
    %0 = vector.load %arg0[%c0, %c0_0] : memref<8x512xf32, #tpu.memory_space<vmem>>, vector<8x512xf32>
    %1 = vector.extract_strided_slice %0 {offsets = [0, 0], sizes = [8, 384], strides = [1, 1]} : vector<8x512xf32> to vector<8x384xf32>
    %2 = vector.extract_strided_slice %0 {offsets = [0, 1], sizes = [8, 384], strides = [1, 1]} : vector<8x512xf32> to vector<8x384xf32>
    %3 = vector.extract_strided_slice %0 {offsets = [0, 2], sizes = [8, 384], strides = [1, 1]} : vector<8x512xf32> to vector<8x384xf32>
    %4 = vector.extract_strided_slice %0 {offsets = [0, 3], sizes = [8, 384], strides = [1, 1]} : vector<8x512xf32> to vector<8x384xf32>
    %5 = vector.extract_strided_slice %0 {offsets = [0, 20], sizes = [8, 384], strides = [1, 1]} : vector<8x512xf32> to vector<8x384xf32>
    %6 = vector.extract_strided_slice %0 {offsets = [0, 21], sizes = [8, 384], strides = [1, 1]} : vector<8x512xf32> to vector<8x384xf32>
    %7 = vector.extract_strided_slice %0 {offsets = [0, 22], sizes = [8, 384], strides = [1, 1]} : vector<8x512xf32> to vector<8x384xf32>
    %8 = vector.extract_strided_slice %0 {offsets = [0, 23], sizes = [8, 384], strides = [1, 1]} : vector<8x512xf32> to vector<8x384xf32>
    %9 = vector.extract_strided_slice %0 {offsets = [0, 40], sizes = [8, 384], strides = [1, 1]} : vector<8x512xf32> to vector<8x384xf32>
    %10 = vector.extract_strided_slice %0 {offsets = [0, 41], sizes = [8, 384], strides = [1, 1]} : vector<8x512xf32> to vector<8x384xf32>
    %11 = vector.extract_strided_slice %0 {offsets = [0, 42], sizes = [8, 384], strides = [1, 1]} : vector<8x512xf32> to vector<8x384xf32>
    %12 = vector.extract_strided_slice %0 {offsets = [0, 43], sizes = [8, 384], strides = [1, 1]} : vector<8x512xf32> to vector<8x384xf32>
    %13 = vector.extract_strided_slice %0 {offsets = [0, 60], sizes = [8, 384], strides = [1, 1]} : vector<8x512xf32> to vector<8x384xf32>
    %14 = vector.extract_strided_slice %0 {offsets = [0, 61], sizes = [8, 384], strides = [1, 1]} : vector<8x512xf32> to vector<8x384xf32>
    %15 = vector.extract_strided_slice %0 {offsets = [0, 62], sizes = [8, 384], strides = [1, 1]} : vector<8x512xf32> to vector<8x384xf32>
    %16 = vector.extract_strided_slice %0 {offsets = [0, 63], sizes = [8, 384], strides = [1, 1]} : vector<8x512xf32> to vector<8x384xf32>
    %17 = tpu.concatenate %1, %2, %3, %4, %5, %6, %7, %8, %9, %10, %11, %12, %13, %14, %15, %16 in 0 : vector<8x384xf32>, vector<8x384xf32>, vector<8x384xf32>, vector<8x384xf32>, vector<8x384xf32>, vector<8x384xf32>, vector<8x384xf32>, vector<8x384xf32>, vector<8x384xf32>, vector<8x384xf32>, vector<8x384xf32>, vector<8x384xf32>, vector<8x384xf32>, vector<8x384xf32>, vector<8x384xf32>, vector<8x384xf32> -> vector<128x384xf32>
    %c0_1 = arith.constant 0 : index
    %c0_2 = arith.constant 0 : index
    %18 = vector.load %arg1[%c0_1, %c0_2] : memref<16x128xf32, #tpu.memory_space<vmem>>, vector<16x128xf32>
    %cst = arith.constant dense<0.000000e+00> : vector<16x384xf32>
    %19 = tpu.matmul %18, %17, %cst {dimension_numbers = #tpu.dot_dimension_numbers<[1], [0], [0], [1], [0, 0, 1, 1], [], []>, precision = #tpu.contract_precision<fp32>} : vector<16x128xf32>, vector<128x384xf32>, vector<16x384xf32> -> vector<16x384xf32>
    %cst_3 = arith.constant 0.000000e+00 : f32
    %20 = vector.broadcast %cst_3 : f32 to vector<16x384xf32>
    %21 = arith.cmpf ogt, %19, %20 : vector<16x384xf32>
    %cst_4 = arith.constant -3.27100587 : f32
    %22 = vector.broadcast %cst_4 : f32 to vector<16x384xf32>
    %23 = arith.mulf %19, %22 : vector<16x384xf32>
    %24 = arith.select %21, %19, %23 : vector<16x384xi1>, vector<16x384xf32>
    %c0_5 = arith.constant 0 : index
    %c0_6 = arith.constant 0 : index
    %25 = vector.load %arg2[%c0_5, %c0_6] : memref<16x384xf32, #tpu.memory_space<vmem>>, vector<16x384xf32>
    tpu.vector_store %arg2[%c0_5, %c0_6], %24 {strides = array<i32>} : memref<16x384xf32, #tpu.memory_space<vmem>>, vector<16x384xf32>,
    return
  }
}

</mosaic_0001>

<llo_original>
// kernel: conv_transpose_leaky.1
$region0: #{conv_transpose_leaky.1}
  #allocation0 [shape = 'u32[]', space=smem, size = 0x4, offset = 0x4, fixed_abs, tag = 'smem constant byte address 0x4 - core index']
  #allocation1 [shape = 'u32[144,128]{1,0:T(1,128)}', space=vmem, size = 0x12000, scoped, tag = 'internal scratch']
  %s0 = inlined_call_operand.vmem [shape: f32[8,512], index: 0, kind: input, shape index: {}]
  %s1 = inlined_call_operand.vmem [shape: f32[16,128], index: 1, kind: input, shape index: {}]
  %s2 = inlined_call_operand.vmem [shape: f32[16,384], index: 2, kind: output, shape index: {}]
  %s3 = sld [smem:[#allocation0]]
  $region18: #{conv_transpose_leaky.1} parent=0
    _
  %s5 = ssub.s32 1, %s3
  %s6 = scalar_select 0, %s5, %s3
  // Predicated region
  $region2: #{conv_transpose_leaky.1} parent=0 // pred_check
    _
  $region3: #{conv_transpose_leaky.1} parent=0 // pred_check_branch
    %8 = sbr.rel (0) target = $region5
  $region4: #{conv_transpose_leaky.1} parent=0 // pred_region
    _
  $region5: #{conv_transpose_leaky.1} parent=0 // pred_fallthru
    _
  // Predicated region
  $region6: #{conv_transpose_leaky.1} parent=0 // pred_check
    _
  $region7: #{conv_transpose_leaky.1} parent=0 // pred_check_branch
    %10 = sbr.rel (0) target = $region9
  $region8: #{conv_transpose_leaky.1} parent=0 // pred_region
    _
  $region9: #{conv_transpose_leaky.1} parent=0 // pred_fallthru
    _
  %v11 = vld [vmem:[%s0] sm:$0xff]
  %v12 = vld [vmem:[%s0 + $0x8] sm:$0xff]
  %v13 = vld [vmem:[%s0 + $0x10] sm:$0xff]
  %v14 = vld [vmem:[%s0 + $0x18] sm:$0xff]
  %19 = vrot.lane.b32.xlu0 %v11, 127
  %v20 = vpop.permute.xlu0 %19
  %21 = vrot.lane.b32.xlu0 %v12, 127
  %v22 = vpop.permute.xlu0 %21
  %23 = vrot.lane.b32.xlu0 %v13, 127
  %v24 = vpop.permute.xlu0 %23
  %25 = vrot.lane.b32.xlu0 %v14, 127
  %v26 = vpop.permute.xlu0 %25
  %vm27 = vcmask 1039360
  %v28 = vsel %vm27, %v20, %v22
  %v29 = vsel %vm27, %v22, %v24
  %v30 = vsel %vm27, %v24, %v26
  %34 = vrot.lane.b32.xlu0 %v11, 126
  %v35 = vpop.permute.xlu0 %34
  %36 = vrot.lane.b32.xlu0 %v12, 126
  %v37 = vpop.permute.xlu0 %36
  %38 = vrot.lane.b32.xlu0 %v13, 126
  %v39 = vpop.permute.xlu0 %38
  %40 = vrot.lane.b32.xlu0 %v14, 126
  %v41 = vpop.permute.xlu0 %40
  %vm42 = vcmask 1031168
  %v43 = vsel %vm42, %v35, %v37
  %v44 = vsel %vm42, %v37, %v39
  %v45 = vsel %vm42, %v39, %v41
  %49 = vrot.lane.b32.xlu0 %v11, 125
  %v50 = vpop.permute.xlu0 %49
  %51 = vrot.lane.b32.xlu0 %v12, 125
  %v52 = vpop.permute.xlu0 %51
  %53 = vrot.lane.b32.xlu0 %v13, 125
  %v54 = vpop.permute.xlu0 %53
  %55 = vrot.lane.b32.xlu0 %v14, 125
  %v56 = vpop.permute.xlu0 %55
  %vm57 = vcmask 1022976
  %v58 = vsel %vm57, %v50, %v52
  %v59 = vsel %vm57, %v52, %v54
  %v60 = vsel %vm57, %v54, %v56
  %64 = vrot.lane.b32.xlu0 %v11, 108
  %v65 = vpop.permute.xlu0 %64
  %66 = vrot.lane.b32.xlu0 %v12, 108
  %v67 = vpop.permute.xlu0 %66
  %68 = vrot.lane.b32.xlu0 %v13, 108
  %v69 = vpop.permute.xlu0 %68
  %70 = vrot.lane.b32.xlu0 %v14, 108
  %v71 = vpop.permute.xlu0 %70
  %vm72 = vcmask 883712
  %v73 = vsel %vm72, %v65, %v67
  %v74 = vsel %vm72, %v67, %v69
  %v75 = vsel %vm72, %v69, %v71
  %79 = vrot.lane.b32.xlu0 %v11, 107
  %v80 = vpop.permute.xlu0 %79
  %81 = vrot.lane.b32.xlu0 %v12, 107
  %v82 = vpop.permute.xlu0 %81
  %83 = vrot.lane.b32.xlu0 %v13, 107
  %v84 = vpop.permute.xlu0 %83
  %85 = vrot.lane.b32.xlu0 %v14, 107
  %v86 = vpop.permute.xlu0 %85
  %vm87 = vcmask 875520
  %v88 = vsel %vm87, %v80, %v82
  %v89 = vsel %vm87, %v82, %v84
  %v90 = vsel %vm87, %v84, %v86
  %94 = vrot.lane.b32.xlu0 %v11, 106
  %v95 = vpop.permute.xlu0 %94
  %96 = vrot.lane.b32.xlu0 %v12, 106
  %v97 = vpop.permute.xlu0 %96
  %98 = vrot.lane.b32.xlu0 %v13, 106
  %v99 = vpop.permute.xlu0 %98
  %100 = vrot.lane.b32.xlu0 %v14, 106
  %v101 = vpop.permute.xlu0 %100
  %vm102 = vcmask 867328
  %v103 = vsel %vm102, %v95, %v97
  %v104 = vsel %vm102, %v97, %v99
  %v105 = vsel %vm102, %v99, %v101
  %109 = vrot.lane.b32.xlu0 %v11, 105
  %v110 = vpop.permute.xlu0 %109
  %111 = vrot.lane.b32.xlu0 %v12, 105
  %v112 = vpop.permute.xlu0 %111
  %113 = vrot.lane.b32.xlu0 %v13, 105
  %v114 = vpop.permute.xlu0 %113
  %115 = vrot.lane.b32.xlu0 %v14, 105
  %v116 = vpop.permute.xlu0 %115
  %vm117 = vcmask 859136
  %v118 = vsel %vm117, %v110, %v112
  %v119 = vsel %vm117, %v112, %v114
  %v120 = vsel %vm117, %v114, %v116
  %124 = vrot.lane.b32.xlu0 %v11, 88
  %v125 = vpop.permute.xlu0 %124
  %126 = vrot.lane.b32.xlu0 %v12, 88
  %v127 = vpop.permute.xlu0 %126
  %128 = vrot.lane.b32.xlu0 %v13, 88
  %v129 = vpop.permute.xlu0 %128
  %130 = vrot.lane.b32.xlu0 %v14, 88
  %v131 = vpop.permute.xlu0 %130
  %vm132 = vcmask 719872
  %v133 = vsel %vm132, %v125, %v127
  %v134 = vsel %vm132, %v127, %v129
  %v135 = vsel %vm132, %v129, %v131
  %139 = vrot.lane.b32.xlu0 %v11, 87
  %v140 = vpop.permute.xlu0 %139
  %141 = vrot.lane.b32.xlu0 %v12, 87
  %v142 = vpop.permute.xlu0 %141
  %143 = vrot.lane.b32.xlu0 %v13, 87
  %v144 = vpop.permute.xlu0 %143
  %145 = vrot.lane.b32.xlu0 %v14, 87
  %v146 = vpop.permute.xlu0 %145
  %vm147 = vcmask 711680
  %v148 = vsel %vm147, %v140, %v142
  %v149 = vsel %vm147, %v142, %v144
  %v150 = vsel %vm147, %v144, %v146
  %154 = vrot.lane.b32.xlu0 %v11, 86
  %v155 = vpop.permute.xlu0 %154
  %156 = vrot.lane.b32.xlu0 %v12, 86
  %v157 = vpop.permute.xlu0 %156
  %158 = vrot.lane.b32.xlu0 %v13, 86
  %v159 = vpop.permute.xlu0 %158
  %160 = vrot.lane.b32.xlu0 %v14, 86
  %v161 = vpop.permute.xlu0 %160
  %vm162 = vcmask 703488
  %v163 = vsel %vm162, %v155, %v157
  %v164 = vsel %vm162, %v157, %v159
  %v165 = vsel %vm162, %v159, %v161
  %169 = vrot.lane.b32.xlu0 %v11, 85
  %v170 = vpop.permute.xlu0 %169
  %171 = vrot.lane.b32.xlu0 %v12, 85
  %v172 = vpop.permute.xlu0 %171
  %173 = vrot.lane.b32.xlu0 %v13, 85
  %v174 = vpop.permute.xlu0 %173
  %175 = vrot.lane.b32.xlu0 %v14, 85
  %v176 = vpop.permute.xlu0 %175
  %vm177 = vcmask 695296
  %v178 = vsel %vm177, %v170, %v172
  %v179 = vsel %vm177, %v172, %v174
  %v180 = vsel %vm177, %v174, %v176
  %184 = vrot.lane.b32.xlu0 %v11, 68
  %v185 = vpop.permute.xlu0 %184
  %186 = vrot.lane.b32.xlu0 %v12, 68
  %v187 = vpop.permute.xlu0 %186
  %188 = vrot.lane.b32.xlu0 %v13, 68
  %v189 = vpop.permute.xlu0 %188
  %190 = vrot.lane.b32.xlu0 %v14, 68
  %v191 = vpop.permute.xlu0 %190
  %vm192 = vcmask 556032
  %v193 = vsel %vm192, %v185, %v187
  %v194 = vsel %vm192, %v187, %v189
  %v195 = vsel %vm192, %v189, %v191
  %199 = vrot.lane.b32.xlu0 %v11, 67
  %v200 = vpop.permute.xlu0 %199
  %201 = vrot.lane.b32.xlu0 %v12, 67
  %v202 = vpop.permute.xlu0 %201
  %203 = vrot.lane.b32.xlu0 %v13, 67
  %v204 = vpop.permute.xlu0 %203
  %205 = vrot.lane.b32.xlu0 %v14, 67
  %v206 = vpop.permute.xlu0 %205
  %vm207 = vcmask 547840
  %v208 = vsel %vm207, %v200, %v202
  %v209 = vsel %vm207, %v202, %v204
  %v210 = vsel %vm207, %v204, %v206
  %214 = vrot.lane.b32.xlu0 %v11, 66
  %v215 = vpop.permute.xlu0 %214
  %216 = vrot.lane.b32.xlu0 %v12, 66
  %v217 = vpop.permute.xlu0 %216
  %218 = vrot.lane.b32.xlu0 %v13, 66
  %v219 = vpop.permute.xlu0 %218
  %220 = vrot.lane.b32.xlu0 %v14, 66
  %v221 = vpop.permute.xlu0 %220
  %vm222 = vcmask 539648
  %v223 = vsel %vm222, %v215, %v217
  %v224 = vsel %vm222, %v217, %v219
  %v225 = vsel %vm222, %v219, %v221
  %229 = vrot.lane.b32.xlu0 %v11, 65
  %v230 = vpop.permute.xlu0 %229
  %231 = vrot.lane.b32.xlu0 %v12, 65
  %v232 = vpop.permute.xlu0 %231
  %233 = vrot.lane.b32.xlu0 %v13, 65
  %v234 = vpop.permute.xlu0 %233
  %235 = vrot.lane.b32.xlu0 %v14, 65
  %v236 = vpop.permute.xlu0 %235
  %vm237 = vcmask 531456
  %v238 = vsel %vm237, %v230, %v232
  %v239 = vsel %vm237, %v232, %v234
  %v240 = vsel %vm237, %v234, %v236
  %v244 = vld [vmem:[%s1] sm:$0xff]
  %v245 = vld [vmem:[%s1 + $0x8] sm:$0xff]
  %v246 = vand.u32 %v12, 4294901760
  %247 = vmatprep.subr.mxu0 %v246
  %v248 = vand.u32 %v11, 4294901760
  %249 = vmatpush1.msra.mxu0 %v248
  %v250 = vand.u32 %v29, 4294901760
  %251 = vmatprep.subr.mxu0 %v250
  %v252 = vand.u32 %v28, 4294901760
  %253 = vmatpush1.msra.mxu0 %v252
  %v254 = vand.u32 %v44, 4294901760
  %255 = vmatprep.subr.mxu0 %v254
  %v256 = vand.u32 %v43, 4294901760
  %257 = vmatpush1.msra.mxu0 %v256
  %v258 = vand.u32 %v59, 4294901760
  %259 = vmatprep.subr.mxu0 %v258
  %v260 = vand.u32 %v58, 4294901760
  %261 = vmatpush1.msra.mxu0 %v260
  %v262 = vand.u32 %v74, 4294901760
  %263 = vmatprep.subr.mxu0 %v262
  %v264 = vand.u32 %v73, 4294901760
  %265 = vmatpush1.msra.mxu0 %v264
  %v266 = vand.u32 %v89, 4294901760
  %267 = vmatprep.subr.mxu0 %v266
  %v268 = vand.u32 %v88, 4294901760
  %269 = vmatpush1.msra.mxu0 %v268
  %v270 = vand.u32 %v104, 4294901760
  %271 = vmatprep.subr.mxu0 %v270
  %v272 = vand.u32 %v103, 4294901760
  %273 = vmatpush1.msra.mxu0 %v272
  %v274 = vand.u32 %v119, 4294901760
  %275 = vmatprep.subr.mxu0 %v274
  %v276 = vand.u32 %v118, 4294901760
  %277 = vmatpush1.msra.mxu0 %v276
  %v278 = vand.u32 %v134, 4294901760
  %279 = vmatprep.subr.mxu0 %v278
  %v280 = vand.u32 %v133, 4294901760
  %281 = vmatpush1.msra.mxu0 %v280
  %v282 = vand.u32 %v149, 4294901760
  %283 = vmatprep.subr.mxu0 %v282
  %v284 = vand.u32 %v148, 4294901760
  %285 = vmatpush1.msra.mxu0 %v284
  %v286 = vand.u32 %v164, 4294901760
  %287 = vmatprep.subr.mxu0 %v286
  %v288 = vand.u32 %v163, 4294901760
  %289 = vmatpush1.msra.mxu0 %v288
  %v290 = vand.u32 %v179, 4294901760
  %291 = vmatprep.subr.mxu0 %v290
  %v292 = vand.u32 %v178, 4294901760
  %293 = vmatpush1.msra.mxu0 %v292
  %v294 = vand.u32 %v194, 4294901760
  %295 = vmatprep.subr.mxu0 %v294
  %v296 = vand.u32 %v193, 4294901760
  %297 = vmatpush1.msra.mxu0 %v296
  %v298 = vand.u32 %v209, 4294901760
  %299 = vmatprep.subr.mxu0 %v298
  %v300 = vand.u32 %v208, 4294901760
  %301 = vmatpush1.msra.mxu0 %v300
  %v302 = vand.u32 %v224, 4294901760
  %303 = vmatprep.subr.mxu0 %v302
  %v304 = vand.u32 %v223, 4294901760
  %305 = vmatpush1.msra.mxu0 %v304
  %v306 = vand.u32 %v239, 4294901760
  %307 = vmatprep.subr.mxu0 %v306
  %v308 = vand.u32 %v238, 4294901760
  %309 = vmatpush1.msra.mxu0 %v308
  %310 = vmatprep.subr.mxu0 0.0
  %311 = vmatpush1.msra.mxu0 0.0
  %312 = vmatprep.subr.mxu0 0.0
  %313 = vmatpush1.msra.mxu0 0.0
  %314 = vmatprep.subr.mxu0 0.0
  %315 = vmatpush1.msra.mxu0 0.0
  %316 = vmatprep.subr.mxu0 0.0
  %317 = vmatpush1.msra.mxu0 0.0
  %318 = vmatprep.subr.mxu0 0.0
  %319 = vmatpush1.msra.mxu0 0.0
  %320 = vmatprep.subr.mxu0 0.0
  %321 = vmatpush1.msra.mxu0 0.0
  %322 = vmatprep.subr.mxu0 0.0
  %323 = vmatpush1.msra.mxu0 0.0
  %324 = vmatprep.subr.mxu0 0.0
  %325 = vmatpush1.msra.mxu0 0.0
  %326 = vmatprep.subr.mxu0 0.0
  %327 = vmatpush1.msra.mxu0 0.0
  %328 = vmatprep.subr.mxu0 0.0
  %329 = vmatpush1.msra.mxu0 0.0
  %330 = vmatprep.subr.mxu0 0.0
  %331 = vmatpush1.msra.mxu0 0.0
  %332 = vmatprep.subr.mxu0 0.0
  %333 = vmatpush1.msra.mxu0 0.0
  %334 = vmatprep.subr.mxu0 0.0
  %335 = vmatpush1.msra.mxu0 0.0
  %336 = vmatprep.subr.mxu0 0.0
  %337 = vmatpush1.msra.mxu0 0.0
  %338 = vmatprep.subr.mxu0 0.0
  %339 = vmatpush1.msra.mxu0 0.0
  %340 = vmatprep.subr.mxu0 0.0
  %341 = vmatpush1.msra.mxu0 0.0
  %342 = vmatprep.mubr.f32.mxu0 0.0
  %v343 = vand.u32 %v244, 4294901760
  %v344 = vsub.f32 %v244, %v343
  %v345 = vand.u32 %v344, 4294901760
  %v346 = vsub.f32 %v344, %v345
  %v347 = vand.u32 %v346, 4294901760
  %348 = vmatmul.mubr.f32.gmra.mrb[0].mxu0 %v347
  %v349 = vpop.f32.mrb[0].mxu0
  %v350 = vadd.f32 0.0, %v349
  %v351 = vpop.f32.mrb[0].mxu0
  %v352 = vadd.f32 0.0, %v351
  %353 = vmatprep.mubr.f32.mxu0 0.0
  %v354 = vand.u32 %v245, 4294901760
  %v355 = vsub.f32 %v245, %v354
  %v356 = vand.u32 %v355, 4294901760
  %v357 = vsub.f32 %v355, %v356
  %v358 = vand.u32 %v357, 4294901760
  %359 = vmatmul.mubr.f32.gmra.mrb[0].mxu0 %v358
  %v360 = vpop.f32.mrb[0].mxu0
  %v361 = vadd.f32 0.0, %v360
  %v362 = vpop.f32.mrb[0].mxu0
  %v363 = vadd.f32 0.0, %v362
  %364 = vdwg.mxu0
  %v365 = vand.u32 %v12, 4294901760
  %v366 = vsub.f32 %v12, %v365
  %v367 = vand.u32 %v366, 4294901760
  %v368 = vsub.f32 %v366, %v367
  %v369 = vand.u32 %v368, 4294901760
  %370 = vmatprep.subr.mxu0 %v369
  %v371 = vand.u32 %v11, 4294901760
  %v372 = vsub.f32 %v11, %v371
  %v373 = vand.u32 %v372, 4294901760
  %v374 = vsub.f32 %v372, %v373
  %v375 = vand.u32 %v374, 4294901760
  %376 = vmatpush1.msra.mxu0 %v375
  %v377 = vand.u32 %v29, 4294901760
  %v378 = vsub.f32 %v29, %v377
  %v379 = vand.u32 %v378, 4294901760
  %v380 = vsub.f32 %v378, %v379
  %v381 = vand.u32 %v380, 4294901760
  %382 = vmatprep.subr.mxu0 %v381
  %v383 = vand.u32 %v28, 4294901760
  %v384 = vsub.f32 %v28, %v383
  %v385 = vand.u32 %v384, 4294901760
  %v386 = vsub.f32 %v384, %v385
  %v387 = vand.u32 %v386, 4294901760
  %388 = vmatpush1.msra.mxu0 %v387
  %v389 = vand.u32 %v44, 4294901760
  %v390 = vsub.f32 %v44, %v389
  %v391 = vand.u32 %v390, 4294901760
  %v392 = vsub.f32 %v390, %v391
  %v393 = vand.u32 %v392, 4294901760
  %394 = vmatprep.subr.mxu0 %v393
  %v395 = vand.u32 %v43, 4294901760
  %v396 = vsub.f32 %v43, %v395
  %v397 = vand.u32 %v396, 4294901760
  %v398 = vsub.f32 %v396, %v397
  %v399 = vand.u32 %v398, 4294901760
  %400 = vmatpush1.msra.mxu0 %v399
  %v401 = vand.u32 %v59, 4294901760
  %v402 = vsub.f32 %v59, %v401
  %v403 = vand.u32 %v402, 4294901760
  %v404 = vsub.f32 %v402, %v403
  %v405 = vand.u32 %v404, 4294901760
  %406 = vmatprep.subr.mxu0 %v405
  %v407 = vand.u32 %v58, 4294901760
  %v408 = vsub.f32 %v58, %v407
  %v409 = vand.u32 %v408, 4294901760
  %v410 = vsub.f32 %v408, %v409
  %v411 = vand.u32 %v410, 4294901760
  %412 = vmatpush1.msra.mxu0 %v411
  %v413 = vand.u32 %v74, 4294901760
  %v414 = vsub.f32 %v74, %v413
  %v415 = vand.u32 %v414, 4294901760
  %v416 = vsub.f32 %v414, %v415
  %v417 = vand.u32 %v416, 4294901760
  %418 = vmatprep.subr.mxu0 %v417
  %v419 = vand.u32 %v73, 4294901760
  %v420 = vsub.f32 %v73, %v419
  %v421 = vand.u32 %v420, 4294901760
  %v422 = vsub.f32 %v420, %v421
  %v423 = vand.u32 %v422, 4294901760
  %424 = vmatpush1.msra.mxu0 %v423
  %v425 = vand.u32 %v89, 4294901760
  %v426 = vsub.f32 %v89, %v425
  %v427 = vand.u32 %v426, 4294901760
  %v428 = vsub.f32 %v426, %v427
  %v429 = vand.u32 %v428, 4294901760
  %430 = vmatprep.subr.mxu0 %v429
  %v431 = vand.u32 %v88, 4294901760
  %v432 = vsub.f32 %v88, %v431
  %v433 = vand.u32 %v432, 4294901760
  %v434 = vsub.f32 %v432, %v433
  %v435 = vand.u32 %v434, 4294901760
  %436 = vmatpush1.msra.mxu0 %v435
  %v437 = vand.u32 %v104, 4294901760
  %v438 = vsub.f32 %v104, %v437
  %v439 = vand.u32 %v438, 4294901760
  %v440 = vsub.f32 %v438, %v439
  %v441 = vand.u32 %v440, 4294901760
  %442 = vmatprep.subr.mxu0 %v441
  %v443 = vand.u32 %v103, 4294901760
  %v444 = vsub.f32 %v103, %v443
  %v445 = vand.u32 %v444, 4294901760
  %v446 = vsub.f32 %v444, %v445
  %v447 = vand.u32 %v446, 4294901760
  %448 = vmatpush1.msra.mxu0 %v447
  %v449 = vand.u32 %v119, 4294901760
  %v450 = vsub.f32 %v119, %v449
  %v451 = vand.u32 %v450, 4294901760
  %v452 = vsub.f32 %v450, %v451
  %v453 = vand.u32 %v452, 4294901760
  %454 = vmatprep.subr.mxu0 %v453
  %v455 = vand.u32 %v118, 4294901760
  %v456 = vsub.f32 %v118, %v455
  %v457 = vand.u32 %v456, 4294901760
  %v458 = vsub.f32 %v456, %v457
  %v459 = vand.u32 %v458, 4294901760
  %460 = vmatpush1.msra.mxu0 %v459
  %v461 = vand.u32 %v134, 4294901760
  %v462 = vsub.f32 %v134, %v461
  %v463 = vand.u32 %v462, 4294901760
  %v464 = vsub.f32 %v462, %v463
  %v465 = vand.u32 %v464, 4294901760
  %466 = vmatprep.subr.mxu0 %v465
  %v467 = vand.u32 %v133, 4294901760
  %v468 = vsub.f32 %v133, %v467
  %v469 = vand.u32 %v468, 4294901760
  %v470 = vsub.f32 %v468, %v469
  %v471 = vand.u32 %v470, 4294901760
  %472 = vmatpush1.msra.mxu0 %v471
  %v473 = vand.u32 %v149, 4294901760
  %v474 = vsub.f32 %v149, %v473
  %v475 = vand.u32 %v474, 4294901760
  %v476 = vsub.f32 %v474, %v475
  %v477 = vand.u32 %v476, 4294901760
  %478 = vmatprep.subr.mxu0 %v477
  %v479 = vand.u32 %v148, 4294901760
  %v480 = vsub.f32 %v148, %v479
  %v481 = vand.u32 %v480, 4294901760
  %v482 = vsub.f32 %v480, %v481
  %v483 = vand.u32 %v482, 4294901760
  %484 = vmatpush1.msra.mxu0 %v483
  %v485 = vand.u32 %v164, 4294901760
  %v486 = vsub.f32 %v164, %v485
  %v487 = vand.u32 %v486, 4294901760
  %v488 = vsub.f32 %v486, %v487
  %v489 = vand.u32 %v488, 4294901760
  %490 = vmatprep.subr.mxu0 %v489
  %v491 = vand.u32 %v163, 4294901760
  %v492 = vsub.f32 %v163, %v491
  %v493 = vand.u32 %v492, 4294901760
  %v494 = vsub.f32 %v492, %v493
  %v495 = vand.u32 %v494, 4294901760
  %496 = vmatpush1.msra.mxu0 %v495
  %v497 = vand.u32 %v179, 4294901760
  %v498 = vsub.f32 %v179, %v497
  %v499 = vand.u32 %v498, 4294901760
  %v500 = vsub.f32 %v498, %v499
  %v501 = vand.u32 %v500, 4294901760
  %502 = vmatprep.subr.mxu0 %v501
  %v503 = vand.u32 %v178, 4294901760
  %v504 = vsub.f32 %v178, %v503
  %v505 = vand.u32 %v504, 4294901760
  %v506 = vsub.f32 %v504, %v505
  %v507 = vand.u32 %v506, 4294901760
  %508 = vmatpush1.msra.mxu0 %v507
  %v509 = vand.u32 %v194, 4294901760
  %v510 = vsub.f32 %v194, %v509
  %v511 = vand.u32 %v510, 4294901760
  %v512 = vsub.f32 %v510, %v511
  %v513 = vand.u32 %v512, 4294901760
  %514 = vmatprep.subr.mxu0 %v513
  %v515 = vand.u32 %v193, 4294901760
  %v516 = vsub.f32 %v193, %v515
  %v517 = vand.u32 %v516, 4294901760
  %v518 = vsub.f32 %v516, %v517
  %v519 = vand.u32 %v518, 4294901760
  %520 = vmatpush1.msra.mxu0 %v519
  %v521 = vand.u32 %v209, 4294901760
  %v522 = vsub.f32 %v209, %v521
  %v523 = vand.u32 %v522, 4294901760
  %v524 = vsub.f32 %v522, %v523
  %v525 = vand.u32 %v524, 4294901760
  %526 = vmatprep.subr.mxu0 %v525
  %v527 = vand.u32 %v208, 4294901760
  %v528 = vsub.f32 %v208, %v527
  %v529 = vand.u32 %v528, 4294901760
  %v530 = vsub.f32 %v528, %v529
  %v531 = vand.u32 %v530, 4294901760
  %532 = vmatpush1.msra.mxu0 %v531
  %v533 = vand.u32 %v224, 4294901760
  %v534 = vsub.f32 %v224, %v533
  %v535 = vand.u32 %v534, 4294901760
  %v536 = vsub.f32 %v534, %v535
  %v537 = vand.u32 %v536, 4294901760
  %538 = vmatprep.subr.mxu0 %v537
  %v539 = vand.u32 %v223, 4294901760
  %v540 = vsub.f32 %v223, %v539
  %v541 = vand.u32 %v540, 4294901760
  %v542 = vsub.f32 %v540, %v541
  %v543 = vand.u32 %v542, 4294901760
  %544 = vmatpush1.msra.mxu0 %v543
  %v545 = vand.u32 %v239, 4294901760
  %v546 = vsub.f32 %v239, %v545
  %v547 = vand.u32 %v546, 4294901760
  %v548 = vsub.f32 %v546, %v547
  %v549 = vand.u32 %v548, 4294901760
  %550 = vmatprep.subr.mxu0 %v549
  %v551 = vand.u32 %v238, 4294901760
  %v552 = vsub.f32 %v238, %v551
  %v553 = vand.u32 %v552, 4294901760
  %v554 = vsub.f32 %v552, %v553
  %v555 = vand.u32 %v554, 4294901760
  %556 = vmatpush1.msra.mxu0 %v555
  %557 = vmatprep.subr.mxu0 0.0
  %558 = vmatpush1.msra.mxu0 0.0
  %559 = vmatprep.subr.mxu0 0.0
  %560 = vmatpush1.msra.mxu0 0.0
  %561 = vmatprep.subr.mxu0 0.0
  %562 = vmatpush1.msra.mxu0 0.0
  %563 = vmatprep.subr.mxu0 0.0
  %564 = vmatpush1.msra.mxu0 0.0
  %565 = vmatprep.subr.mxu0 0.0
  %566 = vmatpush1.msra.mxu0 0.0
  %567 = vmatprep.subr.mxu0 0.0
  %568 = vmatpush1.msra.mxu0 0.0
  %569 = vmatprep.subr.mxu0 0.0
  %570 = vmatpush1.msra.mxu0 0.0
  %571 = vmatprep.subr.mxu0 0.0
  %572 = vmatpush1.msra.mxu0 0.0
  %573 = vmatprep.subr.mxu0 0.0
  %574 = vmatpush1.msra.mxu0 0.0
  %575 = vmatprep.subr.mxu0 0.0
  %576 = vmatpush1.msra.mxu0 0.0
  %577 = vmatprep.subr.mxu0 0.0
  %578 = vmatpush1.msra.mxu0 0.0
  %579 = vmatprep.subr.mxu0 0.0
  %580 = vmatpush1.msra.mxu0 0.0
  %581 = vmatprep.subr.mxu0 0.0
  %582 = vmatpush1.msra.mxu0 0.0
  %583 = vmatprep.subr.mxu0 0.0
  %584 = vmatpush1.msra.mxu0 0.0
  %585 = vmatprep.subr.mxu0 0.0
  %586 = vmatpush1.msra.mxu0 0.0
  %587 = vmatprep.subr.mxu0 0.0
  %588 = vmatpush1.msra.mxu0 0.0
  %589 = vmatprep.mubr.f32.mxu0 0.0
  %v590 = vand.u32 %v244, 4294901760
  %591 = vmatmul.mubr.f32.gmra.mrb[0].mxu0 %v590
  %v592 = vpop.f32.mrb[0].mxu0
  %v593 = vadd.f32 %v350, %v592
  %v594 = vpop.f32.mrb[0].mxu0
  %v595 = vadd.f32 %v352, %v594
  %596 = vmatprep.mubr.f32.mxu0 0.0
  %v597 = vand.u32 %v245, 4294901760
  %598 = vmatmul.mubr.f32.gmra.mrb[0].mxu0 %v597
  %v599 = vpop.f32.mrb[0].mxu0
  %v600 = vadd.f32 %v361, %v599
  %v601 = vpop.f32.mrb[0].mxu0
  %v602 = vadd.f32 %v363, %v601
  %603 = vdwg.mxu0
  %v604 = vand.u32 %v12, 4294901760
  %v605 = vsub.f32 %v12, %v604
  %606 = vmatprep.subr.mxu0 %v605
  %v607 = vand.u32 %v11, 4294901760
  %v608 = vsub.f32 %v11, %v607
  %609 = vmatpush1.msra.mxu0 %v608
  %v610 = vand.u32 %v29, 4294901760
  %v611 = vsub.f32 %v29, %v610
  %612 = vmatprep.subr.mxu0 %v611
  %v613 = vand.u32 %v28, 4294901760
  %v614 = vsub.f32 %v28, %v613
  %615 = vmatpush1.msra.mxu0 %v614
  %v616 = vand.u32 %v44, 4294901760
  %v617 = vsub.f32 %v44, %v616
  %618 = vmatprep.subr.mxu0 %v617
  %v619 = vand.u32 %v43, 4294901760
  %v620 = vsub.f32 %v43, %v619
  %621 = vmatpush1.msra.mxu0 %v620
  %v622 = vand.u32 %v59, 4294901760
  %v623 = vsub.f32 %v59, %v622
  %624 = vmatprep.subr.mxu0 %v623
  %v625 = vand.u32 %v58, 4294901760
  %v626 = vsub.f32 %v58, %v625
  %627 = vmatpush1.msra.mxu0 %v626
  %v628 = vand.u32 %v74, 4294901760
  %v629 = vsub.f32 %v74, %v628
  %630 = vmatprep.subr.mxu0 %v629
  %v631 = vand.u32 %v73, 4294901760
  %v632 = vsub.f32 %v73, %v631
  %633 = vmatpush1.msra.mxu0 %v632
  %v634 = vand.u32 %v89, 4294901760
  %v635 = vsub.f32 %v89, %v634
  %636 = vmatprep.subr.mxu0 %v635
  %v637 = vand.u32 %v88, 4294901760
  %v638 = vsub.f32 %v88, %v637
  %639 = vmatpush1.msra.mxu0 %v638
  %v640 = vand.u32 %v104, 4294901760
  %v641 = vsub.f32 %v104, %v640
  %642 = vmatprep.subr.mxu0 %v641
  %v643 = vand.u32 %v103, 4294901760
  %v644 = vsub.f32 %v103, %v643
  %645 = vmatpush1.msra.mxu0 %v644
  %v646 = vand.u32 %v119, 4294901760
  %v647 = vsub.f32 %v119, %v646
  %648 = vmatprep.subr.mxu0 %v647
  %v649 = vand.u32 %v118, 4294901760
  %v650 = vsub.f32 %v118, %v649
  %651 = vmatpush1.msra.mxu0 %v650
  %v652 = vand.u32 %v134, 4294901760
  %v653 = vsub.f32 %v134, %v652
  %654 = vmatprep.subr.mxu0 %v653
  %v655 = vand.u32 %v133, 4294901760
  %v656 = vsub.f32 %v133, %v655
  %657 = vmatpush1.msra.mxu0 %v656
  %v658 = vand.u32 %v149, 4294901760
  %v659 = vsub.f32 %v149, %v658
  %660 = vmatprep.subr.mxu0 %v659
  %v661 = vand.u32 %v148, 4294901760
  %v662 = vsub.f32 %v148, %v661
  %663 = vmatpush1.msra.mxu0 %v662
  %v664 = vand.u32 %v164, 4294901760
  %v665 = vsub.f32 %v164, %v664
  %666 = vmatprep.subr.mxu0 %v665
  %v667 = vand.u32 %v163, 4294901760
  %v668 = vsub.f32 %v163, %v667
  %669 = vmatpush1.msra.mxu0 %v668
  %v670 = vand.u32 %v179, 4294901760
  %v671 = vsub.f32 %v179, %v670
  %672 = vmatprep.subr.mxu0 %v671
  %v673 = vand.u32 %v178, 4294901760
  %v674 = vsub.f32 %v178, %v673
  %675 = vmatpush1.msra.mxu0 %v674
  %v676 = vand.u32 %v194, 4294901760
  %v677 = vsub.f32 %v194, %v676
  %678 = vmatprep.subr.mxu0 %v677
  %v679 = vand.u32 %v193, 4294901760
  %v680 = vsub.f32 %v193, %v679
  %681 = vmatpush1.msra.mxu0 %v680
  %v682 = vand.u32 %v209, 4294901760
  %v683 = vsub.f32 %v209, %v682
  %684 = vmatprep.subr.mxu0 %v683
  %v685 = vand.u32 %v208, 4294901760
  %v686 = vsub.f32 %v208, %v685
  %687 = vmatpush1.msra.mxu0 %v686
  %v688 = vand.u32 %v224, 4294901760
  %v689 = vsub.f32 %v224, %v688
  %690 = vmatprep.subr.mxu0 %v689
  %v691 = vand.u32 %v223, 4294901760
  %v692 = vsub.f32 %v223, %v691
  %693 = vmatpush1.msra.mxu0 %v692
  %v694 = vand.u32 %v239, 4294901760
  %v695 = vsub.f32 %v239, %v694
  %696 = vmatprep.subr.mxu0 %v695
  %v697 = vand.u32 %v238, 4294901760
  %v698 = vsub.f32 %v238, %v697
  %699 = vmatpush1.msra.mxu0 %v698
  %700 = vmatprep.subr.mxu0 0.0
  %701 = vmatpush1.msra.mxu0 0.0
  %702 = vmatprep.subr.mxu0 0.0
  %703 = vmatpush1.msra.mxu0 0.0
  %704 = vmatprep.subr.mxu0 0.0
  %705 = vmatpush1.msra.mxu0 0.0
  %706 = vmatprep.subr.mxu0 0.0
  %707 = vmatpush1.msra.mxu0 0.0
  %708 = vmatprep.subr.mxu0 0.0
  %709 = vmatpush1.msra.mxu0 0.0
  %710 = vmatprep.subr.mxu0 0.0
  %711 = vmatpush1.msra.mxu0 0.0
  %712 = vmatprep.subr.mxu0 0.0
  %713 = vmatpush1.msra.mxu0 0.0
  %714 = vmatprep.subr.mxu0 0.0
  %715 = vmatpush1.msra.mxu0 0.0
  %716 = vmatprep.subr.mxu0 0.0
  %717 = vmatpush1.msra.mxu0 0.0
  %718 = vmatprep.subr.mxu0 0.0
  %719 = vmatpush1.msra.mxu0 0.0
  %720 = vmatprep.subr.mxu0 0.0
  %721 = vmatpush1.msra.mxu0 0.0
  %722 = vmatprep.subr.mxu0 0.0
  %723 = vmatpush1.msra.mxu0 0.0
  %724 = vmatprep.subr.mxu0 0.0
  %725 = vmatpush1.msra.mxu0 0.0
  %726 = vmatprep.subr.mxu0 0.0
  %727 = vmatpush1.msra.mxu0 0.0
  %728 = vmatprep.subr.mxu0 0.0
  %729 = vmatpush1.msra.mxu0 0.0
  %730 = vmatprep.subr.mxu0 0.0
  %731 = vmatpush1.msra.mxu0 0.0
  %732 = vmatprep.mubr.f32.mxu0 0.0
  %v733 = vand.u32 %v244, 4294901760
  %v734 = vsub.f32 %v244, %v733
  %735 = vmatmul.mubr.f32.gmra.mrb[0].mxu0 %v734
  %v736 = vpop.f32.mrb[0].mxu0
  %v737 = vadd.f32 %v593, %v736
  %v738 = vpop.f32.mrb[0].mxu0
  %v739 = vadd.f32 %v595, %v738
  %740 = vmatprep.mubr.f32.mxu0 0.0
  %v741 = vand.u32 %v245, 4294901760
  %v742 = vsub.f32 %v245, %v741
  %743 = vmatmul.mubr.f32.gmra.mrb[0].mxu0 %v742
  %v744 = vpop.f32.mrb[0].mxu0
  %v745 = vadd.f32 %v600, %v744
  %v746 = vpop.f32.mrb[0].mxu0
  %v747 = vadd.f32 %v602, %v746
  %748 = vdwg.mxu0
  %v749 = vand.u32 %v12, 4294901760
  %750 = vmatprep.subr.mxu0 %v749
  %v751 = vand.u32 %v11, 4294901760
  %752 = vmatpush1.msra.mxu0 %v751
  %v753 = vand.u32 %v29, 4294901760
  %754 = vmatprep.subr.mxu0 %v753
  %v755 = vand.u32 %v28, 4294901760
  %756 = vmatpush1.msra.mxu0 %v755
  %v757 = vand.u32 %v44, 4294901760
  %758 = vmatprep.subr.mxu0 %v757
  %v759 = vand.u32 %v43, 4294901760
  %760 = vmatpush1.msra.mxu0 %v759
  %v761 = vand.u32 %v59, 4294901760
  %762 = vmatprep.subr.mxu0 %v761
  %v763 = vand.u32 %v58, 4294901760
  %764 = vmatpush1.msra.mxu0 %v763
  %v765 = vand.u32 %v74, 4294901760
  %766 = vmatprep.subr.mxu0 %v765
  %v767 = vand.u32 %v73, 4294901760
  %768 = vmatpush1.msra.mxu0 %v767
  %v769 = vand.u32 %v89, 4294901760
  %770 = vmatprep.subr.mxu0 %v769
  %v771 = vand.u32 %v88, 4294901760
  %772 = vmatpush1.msra.mxu0 %v771
  %v773 = vand.u32 %v104, 4294901760
  %774 = vmatprep.subr.mxu0 %v773
  %v775 = vand.u32 %v103, 4294901760
  %776 = vmatpush1.msra.mxu0 %v775
  %v777 = vand.u32 %v119, 4294901760
  %778 = vmatprep.subr.mxu0 %v777
  %v779 = vand.u32 %v118, 4294901760
  %780 = vmatpush1.msra.mxu0 %v779
  %v781 = vand.u32 %v134, 4294901760
  %782 = vmatprep.subr.mxu0 %v781
  %v783 = vand.u32 %v133, 4294901760
  %784 = vmatpush1.msra.mxu0 %v783
  %v785 = vand.u32 %v149, 4294901760
  %786 = vmatprep.subr.mxu0 %v785
  %v787 = vand.u32 %v148, 4294901760
  %788 = vmatpush1.msra.mxu0 %v787
  %v789 = vand.u32 %v164, 4294901760
  %790 = vmatprep.subr.mxu0 %v789
  %v791 = vand.u32 %v163, 4294901760
  %792 = vmatpush1.msra.mxu0 %v791
  %v793 = vand.u32 %v179, 4294901760
  %794 = vmatprep.subr.mxu0 %v793
  %v795 = vand.u32 %v178, 4294901760
  %796 = vmatpush1.msra.mxu0 %v795
  %v797 = vand.u32 %v194, 4294901760
  %798 = vmatprep.subr.mxu0 %v797
  %v799 = vand.u32 %v193, 4294901760
  %800 = vmatpush1.msra.mxu0 %v799
  %v801 = vand.u32 %v209, 4294901760
  %802 = vmatprep.subr.mxu0 %v801
  %v803 = vand.u32 %v208, 4294901760
  %804 = vmatpush1.msra.mxu0 %v803
  %v805 = vand.u32 %v224, 4294901760
  %806 = vmatprep.subr.mxu0 %v805
  %v807 = vand.u32 %v223, 4294901760
  %808 = vmatpush1.msra.mxu0 %v807
  %v809 = vand.u32 %v239, 4294901760
  %810 = vmatprep.subr.mxu0 %v809
  %v811 = vand.u32 %v238, 4294901760
  %812 = vmatpush1.msra.mxu0 %v811
  %813 = vmatprep.subr.mxu0 0.0
  %814 = vmatpush1.msra.mxu0 0.0
  %815 = vmatprep.subr.mxu0 0.0
  %816 = vmatpush1.msra.mxu0 0.0
  %817 = vmatprep.subr.mxu0 0.0
  %818 = vmatpush1.msra.mxu0 0.0
  %819 = vmatprep.subr.mxu0 0.0
  %820 = vmatpush1.msra.mxu0 0.0
  %821 = vmatprep.subr.mxu0 0.0
  %822 = vmatpush1.msra.mxu0 0.0
  %823 = vmatprep.subr.mxu0 0.0
  %824 = vmatpush1.msra.mxu0 0.0
  %825 = vmatprep.subr.mxu0 0.0
  %826 = vmatpush1.msra.mxu0 0.0
  %827 = vmatprep.subr.mxu0 0.0
  %828 = vmatpush1.msra.mxu0 0.0
  %829 = vmatprep.subr.mxu0 0.0
  %830 = vmatpush1.msra.mxu0 0.0
  %831 = vmatprep.subr.mxu0 0.0
  %832 = vmatpush1.msra.mxu0 0.0
  %833 = vmatprep.subr.mxu0 0.0
  %834 = vmatpush1.msra.mxu0 0.0
  %835 = vmatprep.subr.mxu0 0.0
  %836 = vmatpush1.msra.mxu0 0.0
  %837 = vmatprep.subr.mxu0 0.0
  %838 = vmatpush1.msra.mxu0 0.0
  %839 = vmatprep.subr.mxu0 0.0
  %840 = vmatpush1.msra.mxu0 0.0
  %841 = vmatprep.subr.mxu0 0.0
  %842 = vmatpush1.msra.mxu0 0.0
  %843 = vmatprep.subr.mxu0 0.0
  %844 = vmatpush1.msra.mxu0 0.0
  %845 = vmatprep.mubr.f32.mxu0 0.0
  %v846 = vand.u32 %v244, 4294901760
  %v847 = vsub.f32 %v244, %v846
  %v848 = vand.u32 %v847, 4294901760
  %849 = vmatmul.mubr.f32.gmra.mrb[0].mxu0 %v848
  %v850 = vpop.f32.mrb[0].mxu0
  %v851 = vadd.f32 %v737, %v850
  %v852 = vpop.f32.mrb[0].mxu0
  %v853 = vadd.f32 %v739, %v852
  %854 = vmatprep.mubr.f32.mxu0 0.0
  %v855 = vand.u32 %v245, 4294901760
  %v856 = vsub.f32 %v245, %v855
  %v857 = vand.u32 %v856, 4294901760
  %858 = vmatmul.mubr.f32.gmra.mrb[0].mxu0 %v857
  %v859 = vpop.f32.mrb[0].mxu0
  %v860 = vadd.f32 %v745, %v859
  %v861 = vpop.f32.mrb[0].mxu0
  %v862 = vadd.f32 %v747, %v861
  %863 = vdwg.mxu0
  %v864 = vand.u32 %v12, 4294901760
  %v865 = vsub.f32 %v12, %v864
  %v866 = vand.u32 %v865, 4294901760
  %867 = vmatprep.subr.mxu0 %v866
  %v868 = vand.u32 %v11, 4294901760
  %v869 = vsub.f32 %v11, %v868
  %v870 = vand.u32 %v869, 4294901760
  %871 = vmatpush1.msra.mxu0 %v870
  %v872 = vand.u32 %v29, 4294901760
  %v873 = vsub.f32 %v29, %v872
  %v874 = vand.u32 %v873, 4294901760
  %875 = vmatprep.subr.mxu0 %v874
  %v876 = vand.u32 %v28, 4294901760
  %v877 = vsub.f32 %v28, %v876
  %v878 = vand.u32 %v877, 4294901760
  %879 = vmatpush1.msra.mxu0 %v878
  %v880 = vand.u32 %v44, 4294901760
  %v881 = vsub.f32 %v44, %v880
  %v882 = vand.u32 %v881, 4294901760
  %883 = vmatprep.subr.mxu0 %v882
  %v884 = vand.u32 %v43, 4294901760
  %v885 = vsub.f32 %v43, %v884
  %v886 = vand.u32 %v885, 4294901760
  %887 = vmatpush1.msra.mxu0 %v886
  %v888 = vand.u32 %v59, 4294901760
  %v889 = vsub.f32 %v59, %v888
  %v890 = vand.u32 %v889, 4294901760
  %891 = vmatprep.subr.mxu0 %v890
  %v892 = vand.u32 %v58, 4294901760
  %v893 = vsub.f32 %v58, %v892
  %v894 = vand.u32 %v893, 4294901760
  %895 = vmatpush1.msra.mxu0 %v894
  %v896 = vand.u32 %v74, 4294901760
  %v897 = vsub.f32 %v74, %v896
  %v898 = vand.u32 %v897, 4294901760
  %899 = vmatprep.subr.mxu0 %v898
  %v900 = vand.u32 %v73, 4294901760
  %v901 = vsub.f32 %v73, %v900
  %v902 = vand.u32 %v901, 4294901760
  %903 = vmatpush1.msra.mxu0 %v902
  %v904 = vand.u32 %v89, 4294901760
  %v905 = vsub.f32 %v89, %v904
  %v906 = vand.u32 %v905, 4294901760
  %907 = vmatprep.subr.mxu0 %v906
  %v908 = vand.u32 %v88, 4294901760
  %v909 = vsub.f32 %v88, %v908
  %v910 = vand.u32 %v909, 4294901760
  %911 = vmatpush1.msra.mxu0 %v910
  %v912 = vand.u32 %v104, 4294901760
  %v913 = vsub.f32 %v104, %v912
  %v914 = vand.u32 %v913, 4294901760
  %915 = vmatprep.subr.mxu0 %v914
  %v916 = vand.u32 %v103, 4294901760
  %v917 = vsub.f32 %v103, %v916
  %v918 = vand.u32 %v917, 4294901760
  %919 = vmatpush1.msra.mxu0 %v918
  %v920 = vand.u32 %v119, 4294901760
  %v921 = vsub.f32 %v119, %v920
  %v922 = vand.u32 %v921, 4294901760
  %923 = vmatprep.subr.mxu0 %v922
  %v924 = vand.u32 %v118, 4294901760
  %v925 = vsub.f32 %v118, %v924
  %v926 = vand.u32 %v925, 4294901760
  %927 = vmatpush1.msra.mxu0 %v926
  %v928 = vand.u32 %v134, 4294901760
  %v929 = vsub.f32 %v134, %v928
  %v930 = vand.u32 %v929, 4294901760
  %931 = vmatprep.subr.mxu0 %v930
  %v932 = vand.u32 %v133, 4294901760
  %v933 = vsub.f32 %v133, %v932
  %v934 = vand.u32 %v933, 4294901760
  %935 = vmatpush1.msra.mxu0 %v934
  %v936 = vand.u32 %v149, 4294901760
  %v937 = vsub.f32 %v149, %v936
  %v938 = vand.u32 %v937, 4294901760
  %939 = vmatprep.subr.mxu0 %v938
  %v940 = vand.u32 %v148, 4294901760
  %v941 = vsub.f32 %v148, %v940
  %v942 = vand.u32 %v941, 4294901760
  %943 = vmatpush1.msra.mxu0 %v942
  %v944 = vand.u32 %v164, 4294901760
  %v945 = vsub.f32 %v164, %v944
  %v946 = vand.u32 %v945, 4294901760
  %947 = vmatprep.subr.mxu0 %v946
  %v948 = vand.u32 %v163, 4294901760
  %v949 = vsub.f32 %v163, %v948
  %v950 = vand.u32 %v949, 4294901760
  %951 = vmatpush1.msra.mxu0 %v950
  %v952 = vand.u32 %v179, 4294901760
  %v953 = vsub.f32 %v179, %v952
  %v954 = vand.u32 %v953, 4294901760
  %955 = vmatprep.subr.mxu0 %v954
  %v956 = vand.u32 %v178, 4294901760
  %v957 = vsub.f32 %v178, %v956
  %v958 = vand.u32 %v957, 4294901760
  %959 = vmatpush1.msra.mxu0 %v958
  %v960 = vand.u32 %v194, 4294901760
  %v961 = vsub.f32 %v194, %v960
  %v962 = vand.u32 %v961, 4294901760
  %963 = vmatprep.subr.mxu0 %v962
  %v964 = vand.u32 %v193, 4294901760
  %v965 = vsub.f32 %v193, %v964
  %v966 = vand.u32 %v965, 4294901760
  %967 = vmatpush1.msra.mxu0 %v966
  %v968 = vand.u32 %v209, 4294901760
  %v969 = vsub.f32 %v209, %v968
  %v970 = vand.u32 %v969, 4294901760
  %971 = vmatprep.subr.mxu0 %v970
  %v972 = vand.u32 %v208, 4294901760
  %v973 = vsub.f32 %v208, %v972
  %v974 = vand.u32 %v973, 4294901760
  %975 = vmatpush1.msra.mxu0 %v974
  %v976 = vand.u32 %v224, 4294901760
  %v977 = vsub.f32 %v224, %v976
  %v978 = vand.u32 %v977, 4294901760
  %979 = vmatprep.subr.mxu0 %v978
  %v980 = vand.u32 %v223, 4294901760
  %v981 = vsub.f32 %v223, %v980
  %v982 = vand.u32 %v981, 4294901760
  %983 = vmatpush1.msra.mxu0 %v982
  %v984 = vand.u32 %v239, 4294901760
  %v985 = vsub.f32 %v239, %v984
  %v986 = vand.u32 %v985, 4294901760
  %987 = vmatprep.subr.mxu0 %v986
  %v988 = vand.u32 %v238, 4294901760
  %v989 = vsub.f32 %v238, %v988
  %v990 = vand.u32 %v989, 4294901760
  %991 = vmatpush1.msra.mxu0 %v990
  %992 = vmatprep.subr.mxu0 0.0
  %993 = vmatpush1.msra.mxu0 0.0
  %994 = vmatprep.subr.mxu0 0.0
  %995 = vmatpush1.msra.mxu0 0.0
  %996 = vmatprep.subr.mxu0 0.0
  %997 = vmatpush1.msra.mxu0 0.0
  %998 = vmatprep.subr.mxu0 0.0
  %999 = vmatpush1.msra.mxu0 0.0
  %1000 = vmatprep.subr.mxu0 0.0
  %1001 = vmatpush1.msra.mxu0 0.0
  %1002 = vmatprep.subr.mxu0 0.0
  %1003 = vmatpush1.msra.mxu0 0.0
  %1004 = vmatprep.subr.mxu0 0.0
  %1005 = vmatpush1.msra.mxu0 0.0
  %1006 = vmatprep.subr.mxu0 0.0
  %1007 = vmatpush1.msra.mxu0 0.0
  %1008 = vmatprep.subr.mxu0 0.0
  %1009 = vmatpush1.msra.mxu0 0.0
  %1010 = vmatprep.subr.mxu0 0.0
  %1011 = vmatpush1.msra.mxu0 0.0
  %1012 = vmatprep.subr.mxu0 0.0
  %1013 = vmatpush1.msra.mxu0 0.0
  %1014 = vmatprep.subr.mxu0 0.0
  %1015 = vmatpush1.msra.mxu0 0.0
  %1016 = vmatprep.subr.mxu0 0.0
  %1017 = vmatpush1.msra.mxu0 0.0
  %1018 = vmatprep.subr.mxu0 0.0
  %1019 = vmatpush1.msra.mxu0 0.0
  %1020 = vmatprep.subr.mxu0 0.0
  %1021 = vmatpush1.msra.mxu0 0.0
  %1022 = vmatprep.subr.mxu0 0.0
  %1023 = vmatpush1.msra.mxu0 0.0
  %1024 = vmatprep.mubr.f32.mxu0 0.0
  %v1025 = vand.u32 %v244, 4294901760
  %1026 = vmatmul.mubr.f32.gmra.mrb[0].mxu0 %v1025
  %v1027 = vpop.f32.mrb[0].mxu0
  %v1028 = vadd.f32 %v851, %v1027
  %v1029 = vpop.f32.mrb[0].mxu0
  %v1030 = vadd.f32 %v853, %v1029
  %1031 = vmatprep.mubr.f32.mxu0 0.0
  %v1032 = vand.u32 %v245, 4294901760
  %1033 = vmatmul.mubr.f32.gmra.mrb[0].mxu0 %v1032
  %v1034 = vpop.f32.mrb[0].mxu0
  %v1035 = vadd.f32 %v860, %v1034
  %v1036 = vpop.f32.mrb[0].mxu0
  %v1037 = vadd.f32 %v862, %v1036
  %1038 = vdwg.mxu0
  %v1039 = vand.u32 %v12, 4294901760
  %1040 = vmatprep.subr.mxu0 %v1039
  %v1041 = vand.u32 %v11, 4294901760
  %1042 = vmatpush1.msra.mxu0 %v1041
  %v1043 = vand.u32 %v29, 4294901760
  %1044 = vmatprep.subr.mxu0 %v1043
  %v1045 = vand.u32 %v28, 4294901760
  %1046 = vmatpush1.msra.mxu0 %v1045
  %v1047 = vand.u32 %v44, 4294901760
  %1048 = vmatprep.subr.mxu0 %v1047
  %v1049 = vand.u32 %v43, 4294901760
  %1050 = vmatpush1.msra.mxu0 %v1049
  %v1051 = vand.u32 %v59, 4294901760
  %1052 = vmatprep.subr.mxu0 %v1051
  %v1053 = vand.u32 %v58, 4294901760
  %1054 = vmatpush1.msra.mxu0 %v1053
  %v1055 = vand.u32 %v74, 4294901760
  %1056 = vmatprep.subr.mxu0 %v1055
  %v1057 = vand.u32 %v73, 4294901760
  %1058 = vmatpush1.msra.mxu0 %v1057
  %v1059 = vand.u32 %v89, 4294901760
  %1060 = vmatprep.subr.mxu0 %v1059
  %v1061 = vand.u32 %v88, 4294901760
  %1062 = vmatpush1.msra.mxu0 %v1061
  %v1063 = vand.u32 %v104, 4294901760
  %1064 = vmatprep.subr.mxu0 %v1063
  %v1065 = vand.u32 %v103, 4294901760
  %1066 = vmatpush1.msra.mxu0 %v1065
  %v1067 = vand.u32 %v119, 4294901760
  %1068 = vmatprep.subr.mxu0 %v1067
  %v1069 = vand.u32 %v118, 4294901760
  %1070 = vmatpush1.msra.mxu0 %v1069
  %v1071 = vand.u32 %v134, 4294901760
  %1072 = vmatprep.subr.mxu0 %v1071
  %v1073 = vand.u32 %v133, 4294901760
  %1074 = vmatpush1.msra.mxu0 %v1073
  %v1075 = vand.u32 %v149, 4294901760
  %1076 = vmatprep.subr.mxu0 %v1075
  %v1077 = vand.u32 %v148, 4294901760
  %1078 = vmatpush1.msra.mxu0 %v1077
  %v1079 = vand.u32 %v164, 4294901760
  %1080 = vmatprep.subr.mxu0 %v1079
  %v1081 = vand.u32 %v163, 4294901760
  %1082 = vmatpush1.msra.mxu0 %v1081
  %v1083 = vand.u32 %v179, 4294901760
  %1084 = vmatprep.subr.mxu0 %v1083
  %v1085 = vand.u32 %v178, 4294901760
  %1086 = vmatpush1.msra.mxu0 %v1085
  %v1087 = vand.u32 %v194, 4294901760
  %1088 = vmatprep.subr.mxu0 %v1087
  %v1089 = vand.u32 %v193, 4294901760
  %1090 = vmatpush1.msra.mxu0 %v1089
  %v1091 = vand.u32 %v209, 4294901760
  %1092 = vmatprep.subr.mxu0 %v1091
  %v1093 = vand.u32 %v208, 4294901760
  %1094 = vmatpush1.msra.mxu0 %v1093
  %v1095 = vand.u32 %v224, 4294901760
  %1096 = vmatprep.subr.mxu0 %v1095
  %v1097 = vand.u32 %v223, 4294901760
  %1098 = vmatpush1.msra.mxu0 %v1097
  %v1099 = vand.u32 %v239, 4294901760
  %1100 = vmatprep.subr.mxu0 %v1099
  %v1101 = vand.u32 %v238, 4294901760
  %1102 = vmatpush1.msra.mxu0 %v1101
  %1103 = vmatprep.subr.mxu0 0.0
  %1104 = vmatpush1.msra.mxu0 0.0
  %1105 = vmatprep.subr.mxu0 0.0
  %1106 = vmatpush1.msra.mxu0 0.0
  %1107 = vmatprep.subr.mxu0 0.0
  %1108 = vmatpush1.msra.mxu0 0.0
  %1109 = vmatprep.subr.mxu0 0.0
  %1110 = vmatpush1.msra.mxu0 0.0
  %1111 = vmatprep.subr.mxu0 0.0
  %1112 = vmatpush1.msra.mxu0 0.0
  %1113 = vmatprep.subr.mxu0 0.0
  %1114 = vmatpush1.msra.mxu0 0.0
  %1115 = vmatprep.subr.mxu0 0.0
  %1116 = vmatpush1.msra.mxu0 0.0
  %1117 = vmatprep.subr.mxu0 0.0
  %1118 = vmatpush1.msra.mxu0 0.0
  %1119 = vmatprep.subr.mxu0 0.0
  %1120 = vmatpush1.msra.mxu0 0.0
  %1121 = vmatprep.subr.mxu0 0.0
  %1122 = vmatpush1.msra.mxu0 0.0
  %1123 = vmatprep.subr.mxu0 0.0
  %1124 = vmatpush1.msra.mxu0 0.0
  %1125 = vmatprep.subr.mxu0 0.0
  %1126 = vmatpush1.msra.mxu0 0.0
  %1127 = vmatprep.subr.mxu0 0.0
  %1128 = vmatpush1.msra.mxu0 0.0
  %1129 = vmatprep.subr.mxu0 0.0
  %1130 = vmatpush1.msra.mxu0 0.0
  %1131 = vmatprep.subr.mxu0 0.0
  %1132 = vmatpush1.msra.mxu0 0.0
  %1133 = vmatprep.subr.mxu0 0.0
  %1134 = vmatpush1.msra.mxu0 0.0
  %1135 = vmatprep.mubr.f32.mxu0 0.0
  %v1136 = vand.u32 %v244, 4294901760
  %1137 = vmatmul.mubr.f32.gmra.mrb[0].mxu0 %v1136
  %v1138 = vpop.f32.mrb[0].mxu0
  %v1139 = vadd.f32 %v1028, %v1138
  %v1140 = vpop.f32.mrb[0].mxu0
  %v1141 = vadd.f32 %v1030, %v1140
  %1142 = vmatprep.mubr.f32.mxu0 0.0
  %v1143 = vand.u32 %v245, 4294901760
  %1144 = vmatmul.mubr.f32.gmra.mrb[0].mxu0 %v1143
  %v1145 = vpop.f32.mrb[0].mxu0
  %v1146 = vadd.f32 %v1035, %v1145
  %v1147 = vpop.f32.mrb[0].mxu0
  %v1148 = vadd.f32 %v1037, %v1147
  %1149 = vdwg.mxu0
  %1150 = vmatprep.subr.mxu0 0.0
  %v1151 = vand.u32 %v13, 4294901760
  %1152 = vmatpush1.msra.mxu0 %v1151
  %1153 = vmatprep.subr.mxu0 0.0
  %v1154 = vand.u32 %v30, 4294901760
  %1155 = vmatpush1.msra.mxu0 %v1154
  %1156 = vmatprep.subr.mxu0 0.0
  %v1157 = vand.u32 %v45, 4294901760
  %1158 = vmatpush1.msra.mxu0 %v1157
  %1159 = vmatprep.subr.mxu0 0.0
  %v1160 = vand.u32 %v60, 4294901760
  %1161 = vmatpush1.msra.mxu0 %v1160
  %1162 = vmatprep.subr.mxu0 0.0
  %v1163 = vand.u32 %v75, 4294901760
  %1164 = vmatpush1.msra.mxu0 %v1163
  %1165 = vmatprep.subr.mxu0 0.0
  %v1166 = vand.u32 %v90, 4294901760
  %1167 = vmatpush1.msra.mxu0 %v1166
  %1168 = vmatprep.subr.mxu0 0.0
  %v1169 = vand.u32 %v105, 4294901760
  %1170 = vmatpush1.msra.mxu0 %v1169
  %1171 = vmatprep.subr.mxu0 0.0
  %v1172 = vand.u32 %v120, 4294901760
  %1173 = vmatpush1.msra.mxu0 %v1172
  %1174 = vmatprep.subr.mxu0 0.0
  %v1175 = vand.u32 %v135, 4294901760
  %1176 = vmatpush1.msra.mxu0 %v1175
  %1177 = vmatprep.subr.mxu0 0.0
  %v1178 = vand.u32 %v150, 4294901760
  %1179 = vmatpush1.msra.mxu0 %v1178
  %1180 = vmatprep.subr.mxu0 0.0
  %v1181 = vand.u32 %v165, 4294901760
  %1182 = vmatpush1.msra.mxu0 %v1181
  %1183 = vmatprep.subr.mxu0 0.0
  %v1184 = vand.u32 %v180, 4294901760
  %1185 = vmatpush1.msra.mxu0 %v1184
  %1186 = vmatprep.subr.mxu0 0.0
  %v1187 = vand.u32 %v195, 4294901760
  %1188 = vmatpush1.msra.mxu0 %v1187
  %1189 = vmatprep.subr.mxu0 0.0
  %v1190 = vand.u32 %v210, 4294901760
  %1191 = vmatpush1.msra.mxu0 %v1190
  %1192 = vmatprep.subr.mxu0 0.0
  %v1193 = vand.u32 %v225, 4294901760
  %1194 = vmatpush1.msra.mxu0 %v1193
  %1195 = vmatprep.subr.mxu0 0.0
  %v1196 = vand.u32 %v240, 4294901760
  %1197 = vmatpush1.msra.mxu0 %v1196
  %1198 = vmatprep.subr.mxu0 0.0
  %1199 = vmatpush1.msra.mxu0 0.0
  %1200 = vmatprep.subr.mxu0 0.0
  %1201 = vmatpush1.msra.mxu0 0.0
  %1202 = vmatprep.subr.mxu0 0.0
  %1203 = vmatpush1.msra.mxu0 0.0
  %1204 = vmatprep.subr.mxu0 0.0
  %1205 = vmatpush1.msra.mxu0 0.0
  %1206 = vmatprep.subr.mxu0 0.0
  %1207 = vmatpush1.msra.mxu0 0.0
  %1208 = vmatprep.subr.mxu0 0.0
  %1209 = vmatpush1.msra.mxu0 0.0
  %1210 = vmatprep.subr.mxu0 0.0
  %1211 = vmatpush1.msra.mxu0 0.0
  %1212 = vmatprep.subr.mxu0 0.0
  %1213 = vmatpush1.msra.mxu0 0.0
  %1214 = vmatprep.subr.mxu0 0.0
  %1215 = vmatpush1.msra.mxu0 0.0
  %1216 = vmatprep.subr.mxu0 0.0
  %1217 = vmatpush1.msra.mxu0 0.0
  %1218 = vmatprep.subr.mxu0 0.0
  %1219 = vmatpush1.msra.mxu0 0.0
  %1220 = vmatprep.subr.mxu0 0.0
  %1221 = vmatpush1.msra.mxu0 0.0
  %1222 = vmatprep.subr.mxu0 0.0
  %1223 = vmatpush1.msra.mxu0 0.0
  %1224 = vmatprep.subr.mxu0 0.0
  %1225 = vmatpush1.msra.mxu0 0.0
  %1226 = vmatprep.subr.mxu0 0.0
  %1227 = vmatpush1.msra.mxu0 0.0
  %1228 = vmatprep.subr.mxu0 0.0
  %1229 = vmatpush1.msra.mxu0 0.0
  %1230 = vmatprep.mubr.f32.mxu0 0.0
  %v1231 = vand.u32 %v244, 4294901760
  %v1232 = vsub.f32 %v244, %v1231
  %v1233 = vand.u32 %v1232, 4294901760
  %v1234 = vsub.f32 %v1232, %v1233
  %v1235 = vand.u32 %v1234, 4294901760
  %1236 = vmatmul.mubr.f32.gmra.mrb[0].mxu0 %v1235
  %v1237 = vpop.f32.mrb[0].mxu0
  %v1238 = vadd.f32 0.0, %v1237
  %v1239 = vpop.f32.mrb[0].mxu0
  %1240 = vmatprep.mubr.f32.mxu0 0.0
  %v1241 = vand.u32 %v245, 4294901760
  %v1242 = vsub.f32 %v245, %v1241
  %v1243 = vand.u32 %v1242, 4294901760
  %v1244 = vsub.f32 %v1242, %v1243
  %v1245 = vand.u32 %v1244, 4294901760
  %1246 = vmatmul.mubr.f32.gmra.mrb[0].mxu0 %v1245
  %v1247 = vpop.f32.mrb[0].mxu0
  %v1248 = vadd.f32 0.0, %v1247
  %v1249 = vpop.f32.mrb[0].mxu0
  %1250 = vdwg.mxu0
  %1251 = vmatprep.subr.mxu0 0.0
  %v1252 = vand.u32 %v13, 4294901760
  %v1253 = vsub.f32 %v13, %v1252
  %v1254 = vand.u32 %v1253, 4294901760
  %v1255 = vsub.f32 %v1253, %v1254
  %v1256 = vand.u32 %v1255, 4294901760
  %1257 = vmatpush1.msra.mxu0 %v1256
  %1258 = vmatprep.subr.mxu0 0.0
  %v1259 = vand.u32 %v30, 4294901760
  %v1260 = vsub.f32 %v30, %v1259
  %v1261 = vand.u32 %v1260, 4294901760
  %v1262 = vsub.f32 %v1260, %v1261
  %v1263 = vand.u32 %v1262, 4294901760
  %1264 = vmatpush1.msra.mxu0 %v1263
  %1265 = vmatprep.subr.mxu0 0.0
  %v1266 = vand.u32 %v45, 4294901760
  %v1267 = vsub.f32 %v45, %v1266
  %v1268 = vand.u32 %v1267, 4294901760
  %v1269 = vsub.f32 %v1267, %v1268
  %v1270 = vand.u32 %v1269, 4294901760
  %1271 = vmatpush1.msra.mxu0 %v1270
  %1272 = vmatprep.subr.mxu0 0.0
  %v1273 = vand.u32 %v60, 4294901760
  %v1274 = vsub.f32 %v60, %v1273
  %v1275 = vand.u32 %v1274, 4294901760
  %v1276 = vsub.f32 %v1274, %v1275
  %v1277 = vand.u32 %v1276, 4294901760
  %1278 = vmatpush1.msra.mxu0 %v1277
  %1279 = vmatprep.subr.mxu0 0.0
  %v1280 = vand.u32 %v75, 4294901760
  %v1281 = vsub.f32 %v75, %v1280
  %v1282 = vand.u32 %v1281, 4294901760
  %v1283 = vsub.f32 %v1281, %v1282
  %v1284 = vand.u32 %v1283, 4294901760
  %1285 = vmatpush1.msra.mxu0 %v1284
  %1286 = vmatprep.subr.mxu0 0.0
  %v1287 = vand.u32 %v90, 4294901760
  %v1288 = vsub.f32 %v90, %v1287
  %v1289 = vand.u32 %v1288, 4294901760
  %v1290 = vsub.f32 %v1288, %v1289
  %v1291 = vand.u32 %v1290, 4294901760
  %1292 = vmatpush1.msra.mxu0 %v1291
  %1293 = vmatprep.subr.mxu0 0.0
  %v1294 = vand.u32 %v105, 4294901760
  %v1295 = vsub.f32 %v105, %v1294
  %v1296 = vand.u32 %v1295, 4294901760
  %v1297 = vsub.f32 %v1295, %v1296
  %v1298 = vand.u32 %v1297, 4294901760
  %1299 = vmatpush1.msra.mxu0 %v1298
  %1300 = vmatprep.subr.mxu0 0.0
  %v1301 = vand.u32 %v120, 4294901760
  %v1302 = vsub.f32 %v120, %v1301
  %v1303 = vand.u32 %v1302, 4294901760
  %v1304 = vsub.f32 %v1302, %v1303
  %v1305 = vand.u32 %v1304, 4294901760
  %1306 = vmatpush1.msra.mxu0 %v1305
  %1307 = vmatprep.subr.mxu0 0.0
  %v1308 = vand.u32 %v135, 4294901760
  %v1309 = vsub.f32 %v135, %v1308
  %v1310 = vand.u32 %v1309, 4294901760
  %v1311 = vsub.f32 %v1309, %v1310
  %v1312 = vand.u32 %v1311, 4294901760
  %1313 = vmatpush1.msra.mxu0 %v1312
  %1314 = vmatprep.subr.mxu0 0.0
  %v1315 = vand.u32 %v150, 4294901760
  %v1316 = vsub.f32 %v150, %v1315
  %v1317 = vand.u32 %v1316, 4294901760
  %v1318 = vsub.f32 %v1316, %v1317
  %v1319 = vand.u32 %v1318, 4294901760
  %1320 = vmatpush1.msra.mxu0 %v1319
  %1321 = vmatprep.subr.mxu0 0.0
  %v1322 = vand.u32 %v165, 4294901760
  %v1323 = vsub.f32 %v165, %v1322
  %v1324 = vand.u32 %v1323, 4294901760
  %v1325 = vsub.f32 %v1323, %v1324
  %v1326 = vand.u32 %v1325, 4294901760
  %1327 = vmatpush1.msra.mxu0 %v1326
  %1328 = vmatprep.subr.mxu0 0.0
  %v1329 = vand.u32 %v180, 4294901760
  %v1330 = vsub.f32 %v180, %v1329
  %v1331 = vand.u32 %v1330, 4294901760
  %v1332 = vsub.f32 %v1330, %v1331
  %v1333 = vand.u32 %v1332, 4294901760
  %1334 = vmatpush1.msra.mxu0 %v1333
  %1335 = vmatprep.subr.mxu0 0.0
  %v1336 = vand.u32 %v195, 4294901760
  %v1337 = vsub.f32 %v195, %v1336
  %v1338 = vand.u32 %v1337, 4294901760
  %v1339 = vsub.f32 %v1337, %v1338
  %v1340 = vand.u32 %v1339, 4294901760
  %1341 = vmatpush1.msra.mxu0 %v1340
  %1342 = vmatprep.subr.mxu0 0.0
  %v1343 = vand.u32 %v210, 4294901760
  %v1344 = vsub.f32 %v210, %v1343
  %v1345 = vand.u32 %v1344, 4294901760
  %v1346 = vsub.f32 %v1344, %v1345
  %v1347 = vand.u32 %v1346, 4294901760
  %1348 = vmatpush1.msra.mxu0 %v1347
  %1349 = vmatprep.subr.mxu0 0.0
  %v1350 = vand.u32 %v225, 4294901760
  %v1351 = vsub.f32 %v225, %v1350
  %v1352 = vand.u32 %v1351, 4294901760
  %v1353 = vsub.f32 %v1351, %v1352
  %v1354 = vand.u32 %v1353, 4294901760
  %1355 = vmatpush1.msra.mxu0 %v1354
  %1356 = vmatprep.subr.mxu0 0.0
  %v1357 = vand.u32 %v240, 4294901760
  %v1358 = vsub.f32 %v240, %v1357
  %v1359 = vand.u32 %v1358, 4294901760
  %v1360 = vsub.f32 %v1358, %v1359
  %v1361 = vand.u32 %v1360, 4294901760
  %1362 = vmatpush1.msra.mxu0 %v1361
  %1363 = vmatprep.subr.mxu0 0.0
  %1364 = vmatpush1.msra.mxu0 0.0
  %1365 = vmatprep.subr.mxu0 0.0
  %1366 = vmatpush1.msra.mxu0 0.0
  %1367 = vmatprep.subr.mxu0 0.0
  %1368 = vmatpush1.msra.mxu0 0.0
  %1369 = vmatprep.subr.mxu0 0.0
  %1370 = vmatpush1.msra.mxu0 0.0
  %1371 = vmatprep.subr.mxu0 0.0
  %1372 = vmatpush1.msra.mxu0 0.0
  %1373 = vmatprep.subr.mxu0 0.0
  %1374 = vmatpush1.msra.mxu0 0.0
  %1375 = vmatprep.subr.mxu0 0.0
  %1376 = vmatpush1.msra.mxu0 0.0
  %1377 = vmatprep.subr.mxu0 0.0
  %1378 = vmatpush1.msra.mxu0 0.0
  %1379 = vmatprep.subr.mxu0 0.0
  %1380 = vmatpush1.msra.mxu0 0.0
  %1381 = vmatprep.subr.mxu0 0.0
  %1382 = vmatpush1.msra.mxu0 0.0
  %1383 = vmatprep.subr.mxu0 0.0
  %1384 = vmatpush1.msra.mxu0 0.0
  %1385 = vmatprep.subr.mxu0 0.0
  %1386 = vmatpush1.msra.mxu0 0.0
  %1387 = vmatprep.subr.mxu0 0.0
  %1388 = vmatpush1.msra.mxu0 0.0
  %1389 = vmatprep.subr.mxu0 0.0
  %1390 = vmatpush1.msra.mxu0 0.0
  %1391 = vmatprep.subr.mxu0 0.0
  %1392 = vmatpush1.msra.mxu0 0.0
  %1393 = vmatprep.subr.mxu0 0.0
  %1394 = vmatpush1.msra.mxu0 0.0
  %1395 = vmatprep.mubr.f32.mxu0 0.0
  %v1396 = vand.u32 %v244, 4294901760
  %1397 = vmatmul.mubr.f32.gmra.mrb[0].mxu0 %v1396
  %v1398 = vpop.f32.mrb[0].mxu0
  %v1399 = vadd.f32 %v1238, %v1398
  %v1400 = vpop.f32.mrb[0].mxu0
  %1401 = vmatprep.mubr.f32.mxu0 0.0
  %v1402 = vand.u32 %v245, 4294901760
  %1403 = vmatmul.mubr.f32.gmra.mrb[0].mxu0 %v1402
  %v1404 = vpop.f32.mrb[0].mxu0
  %v1405 = vadd.f32 %v1248, %v1404
  %v1406 = vpop.f32.mrb[0].mxu0
  %1407 = vdwg.mxu0
  %1408 = vmatprep.subr.mxu0 0.0
  %v1409 = vand.u32 %v13, 4294901760
  %v1410 = vsub.f32 %v13, %v1409
  %1411 = vmatpush1.msra.mxu0 %v1410
  %1412 = vmatprep.subr.mxu0 0.0
  %v1413 = vand.u32 %v30, 4294901760
  %v1414 = vsub.f32 %v30, %v1413
  %1415 = vmatpush1.msra.mxu0 %v1414
  %1416 = vmatprep.subr.mxu0 0.0
  %v1417 = vand.u32 %v45, 4294901760
  %v1418 = vsub.f32 %v45, %v1417
  %1419 = vmatpush1.msra.mxu0 %v1418
  %1420 = vmatprep.subr.mxu0 0.0
  %v1421 = vand.u32 %v60, 4294901760
  %v1422 = vsub.f32 %v60, %v1421
  %1423 = vmatpush1.msra.mxu0 %v1422
  %1424 = vmatprep.subr.mxu0 0.0
  %v1425 = vand.u32 %v75, 4294901760
  %v1426 = vsub.f32 %v75, %v1425
  %1427 = vmatpush1.msra.mxu0 %v1426
  %1428 = vmatprep.subr.mxu0 0.0
  %v1429 = vand.u32 %v90, 4294901760
  %v1430 = vsub.f32 %v90, %v1429
  %1431 = vmatpush1.msra.mxu0 %v1430
  %1432 = vmatprep.subr.mxu0 0.0
  %v1433 = vand.u32 %v105, 4294901760
  %v1434 = vsub.f32 %v105, %v1433
  %1435 = vmatpush1.msra.mxu0 %v1434
  %1436 = vmatprep.subr.mxu0 0.0
  %v1437 = vand.u32 %v120, 4294901760
  %v1438 = vsub.f32 %v120, %v1437
  %1439 = vmatpush1.msra.mxu0 %v1438
  %1440 = vmatprep.subr.mxu0 0.0
  %v1441 = vand.u32 %v135, 4294901760
  %v1442 = vsub.f32 %v135, %v1441
  %1443 = vmatpush1.msra.mxu0 %v1442
  %1444 = vmatprep.subr.mxu0 0.0
  %v1445 = vand.u32 %v150, 4294901760
  %v1446 = vsub.f32 %v150, %v1445
  %1447 = vmatpush1.msra.mxu0 %v1446
  %1448 = vmatprep.subr.mxu0 0.0
  %v1449 = vand.u32 %v165, 4294901760
  %v1450 = vsub.f32 %v165, %v1449
  %1451 = vmatpush1.msra.mxu0 %v1450
  %1452 = vmatprep.subr.mxu0 0.0
  %v1453 = vand.u32 %v180, 4294901760
  %v1454 = vsub.f32 %v180, %v1453
  %1455 = vmatpush1.msra.mxu0 %v1454
  %1456 = vmatprep.subr.mxu0 0.0
  %v1457 = vand.u32 %v195, 4294901760
  %v1458 = vsub.f32 %v195, %v1457
  %1459 = vmatpush1.msra.mxu0 %v1458
  %1460 = vmatprep.subr.mxu0 0.0
  %v1461 = vand.u32 %v210, 4294901760
  %v1462 = vsub.f32 %v210, %v1461
  %1463 = vmatpush1.msra.mxu0 %v1462
  %1464 = vmatprep.subr.mxu0 0.0
  %v1465 = vand.u32 %v225, 4294901760
  %v1466 = vsub.f32 %v225, %v1465
  %1467 = vmatpush1.msra.mxu0 %v1466
  %1468 = vmatprep.subr.mxu0 0.0
  %v1469 = vand.u32 %v240, 4294901760
  %v1470 = vsub.f32 %v240, %v1469
  %1471 = vmatpush1.msra.mxu0 %v1470
  %1472 = vmatprep.subr.mxu0 0.0
  %1473 = vmatpush1.msra.mxu0 0.0
  %1474 = vmatprep.subr.mxu0 0.0
  %1475 = vmatpush1.msra.mxu0 0.0
  %1476 = vmatprep.subr.mxu0 0.0
  %1477 = vmatpush1.msra.mxu0 0.0
  %1478 = vmatprep.subr.mxu0 0.0
  %1479 = vmatpush1.msra.mxu0 0.0
  %1480 = vmatprep.subr.mxu0 0.0
  %1481 = vmatpush1.msra.mxu0 0.0
  %1482 = vmatprep.subr.mxu0 0.0
  %1483 = vmatpush1.msra.mxu0 0.0
  %1484 = vmatprep.subr.mxu0 0.0
  %1485 = vmatpush1.msra.mxu0 0.0
  %1486 = vmatprep.subr.mxu0 0.0
  %1487 = vmatpush1.msra.mxu0 0.0
  %1488 = vmatprep.subr.mxu0 0.0
  %1489 = vmatpush1.msra.mxu0 0.0
  %1490 = vmatprep.subr.mxu0 0.0
  %1491 = vmatpush1.msra.mxu0 0.0
  %1492 = vmatprep.subr.mxu0 0.0
  %1493 = vmatpush1.msra.mxu0 0.0
  %1494 = vmatprep.subr.mxu0 0.0
  %1495 = vmatpush1.msra.mxu0 0.0
  %1496 = vmatprep.subr.mxu0 0.0
  %1497 = vmatpush1.msra.mxu0 0.0
  %1498 = vmatprep.subr.mxu0 0.0
  %1499 = vmatpush1.msra.mxu0 0.0
  %1500 = vmatprep.subr.mxu0 0.0
  %1501 = vmatpush1.msra.mxu0 0.0
  %1502 = vmatprep.subr.mxu0 0.0
  %1503 = vmatpush1.msra.mxu0 0.0
  %1504 = vmatprep.mubr.f32.mxu0 0.0
  %v1505 = vand.u32 %v244, 4294901760
  %v1506 = vsub.f32 %v244, %v1505
  %1507 = vmatmul.mubr.f32.gmra.mrb[0].mxu0 %v1506
  %v1508 = vpop.f32.mrb[0].mxu0
  %v1509 = vadd.f32 %v1399, %v1508
  %v1510 = vpop.f32.mrb[0].mxu0
  %1511 = vmatprep.mubr.f32.mxu0 0.0
  %v1512 = vand.u32 %v245, 4294901760
  %v1513 = vsub.f32 %v245, %v1512
  %1514 = vmatmul.mubr.f32.gmra.mrb[0].mxu0 %v1513
  %v1515 = vpop.f32.mrb[0].mxu0
  %v1516 = vadd.f32 %v1405, %v1515
  %v1517 = vpop.f32.mrb[0].mxu0
  %1518 = vdwg.mxu0
  %1519 = vmatprep.subr.mxu0 0.0
  %v1520 = vand.u32 %v13, 4294901760
  %1521 = vmatpush1.msra.mxu0 %v1520
  %1522 = vmatprep.subr.mxu0 0.0
  %v1523 = vand.u32 %v30, 4294901760
  %1524 = vmatpush1.msra.mxu0 %v1523
  %1525 = vmatprep.subr.mxu0 0.0
  %v1526 = vand.u32 %v45, 4294901760
  %1527 = vmatpush1.msra.mxu0 %v1526
  %1528 = vmatprep.subr.mxu0 0.0
  %v1529 = vand.u32 %v60, 4294901760
  %1530 = vmatpush1.msra.mxu0 %v1529
  %1531 = vmatprep.subr.mxu0 0.0
  %v1532 = vand.u32 %v75, 4294901760
  %1533 = vmatpush1.msra.mxu0 %v1532
  %1534 = vmatprep.subr.mxu0 0.0
  %v1535 = vand.u32 %v90, 4294901760
  %1536 = vmatpush1.msra.mxu0 %v1535
  %1537 = vmatprep.subr.mxu0 0.0
  %v1538 = vand.u32 %v105, 4294901760
  %1539 = vmatpush1.msra.mxu0 %v1538
  %1540 = vmatprep.subr.mxu0 0.0
  %v1541 = vand.u32 %v120, 4294901760
  %1542 = vmatpush1.msra.mxu0 %v1541
  %1543 = vmatprep.subr.mxu0 0.0
  %v1544 = vand.u32 %v135, 4294901760
  %1545 = vmatpush1.msra.mxu0 %v1544
  %1546 = vmatprep.subr.mxu0 0.0
  %v1547 = vand.u32 %v150, 4294901760
  %1548 = vmatpush1.msra.mxu0 %v1547
  %1549 = vmatprep.subr.mxu0 0.0
  %v1550 = vand.u32 %v165, 4294901760
  %1551 = vmatpush1.msra.mxu0 %v1550
  %1552 = vmatprep.subr.mxu0 0.0
  %v1553 = vand.u32 %v180, 4294901760
  %1554 = vmatpush1.msra.mxu0 %v1553
  %1555 = vmatprep.subr.mxu0 0.0
  %v1556 = vand.u32 %v195, 4294901760
  %1557 = vmatpush1.msra.mxu0 %v1556
  %1558 = vmatprep.subr.mxu0 0.0
  %v1559 = vand.u32 %v210, 4294901760
  %1560 = vmatpush1.msra.mxu0 %v1559
  %1561 = vmatprep.subr.mxu0 0.0
  %v1562 = vand.u32 %v225, 4294901760
  %1563 = vmatpush1.msra.mxu0 %v1562
  %1564 = vmatprep.subr.mxu0 0.0
  %v1565 = vand.u32 %v240, 4294901760
  %1566 = vmatpush1.msra.mxu0 %v1565
  %1567 = vmatprep.subr.mxu0 0.0
  %1568 = vmatpush1.msra.mxu0 0.0
  %1569 = vmatprep.subr.mxu0 0.0
  %1570 = vmatpush1.msra.mxu0 0.0
  %1571 = vmatprep.subr.mxu0 0.0
  %1572 = vmatpush1.msra.mxu0 0.0
  %1573 = vmatprep.subr.mxu0 0.0
  %1574 = vmatpush1.msra.mxu0 0.0
  %1575 = vmatprep.subr.mxu0 0.0
  %1576 = vmatpush1.msra.mxu0 0.0
  %1577 = vmatprep.subr.mxu0 0.0
  %1578 = vmatpush1.msra.mxu0 0.0
  %1579 = vmatprep.subr.mxu0 0.0
  %1580 = vmatpush1.msra.mxu0 0.0
  %1581 = vmatprep.subr.mxu0 0.0
  %1582 = vmatpush1.msra.mxu0 0.0
  %1583 = vmatprep.subr.mxu0 0.0
  %1584 = vmatpush1.msra.mxu0 0.0
  %1585 = vmatprep.subr.mxu0 0.0
  %1586 = vmatpush1.msra.mxu0 0.0
  %1587 = vmatprep.subr.mxu0 0.0
  %1588 = vmatpush1.msra.mxu0 0.0
  %1589 = vmatprep.subr.mxu0 0.0
  %1590 = vmatpush1.msra.mxu0 0.0
  %1591 = vmatprep.subr.mxu0 0.0
  %1592 = vmatpush1.msra.mxu0 0.0
  %1593 = vmatprep.subr.mxu0 0.0
  %1594 = vmatpush1.msra.mxu0 0.0
  %1595 = vmatprep.subr.mxu0 0.0
  %1596 = vmatpush1.msra.mxu0 0.0
  %1597 = vmatprep.subr.mxu0 0.0
  %1598 = vmatpush1.msra.mxu0 0.0
  %1599 = vmatprep.mubr.f32.mxu0 0.0
  %v1600 = vand.u32 %v244, 4294901760
  %v1601 = vsub.f32 %v244, %v1600
  %v1602 = vand.u32 %v1601, 4294901760
  %1603 = vmatmul.mubr.f32.gmra.mrb[0].mxu0 %v1602
  %v1604 = vpop.f32.mrb[0].mxu0
  %v1605 = vadd.f32 %v1509, %v1604
  %v1606 = vpop.f32.mrb[0].mxu0
  %1607 = vmatprep.mubr.f32.mxu0 0.0
  %v1608 = vand.u32 %v245, 4294901760
  %v1609 = vsub.f32 %v245, %v1608
  %v1610 = vand.u32 %v1609, 4294901760
  %1611 = vmatmul.mubr.f32.gmra.mrb[0].mxu0 %v1610
  %v1612 = vpop.f32.mrb[0].mxu0
  %v1613 = vadd.f32 %v1516, %v1612
  %v1614 = vpop.f32.mrb[0].mxu0
  %1615 = vdwg.mxu0
  %1616 = vmatprep.subr.mxu0 0.0
  %v1617 = vand.u32 %v13, 4294901760
  %v1618 = vsub.f32 %v13, %v1617
  %v1619 = vand.u32 %v1618, 4294901760
  %1620 = vmatpush1.msra.mxu0 %v1619
  %1621 = vmatprep.subr.mxu0 0.0
  %v1622 = vand.u32 %v30, 4294901760
  %v1623 = vsub.f32 %v30, %v1622
  %v1624 = vand.u32 %v1623, 4294901760
  %1625 = vmatpush1.msra.mxu0 %v1624
  %1626 = vmatprep.subr.mxu0 0.0
  %v1627 = vand.u32 %v45, 4294901760
  %v1628 = vsub.f32 %v45, %v1627
  %v1629 = vand.u32 %v1628, 4294901760
  %1630 = vmatpush1.msra.mxu0 %v1629
  %1631 = vmatprep.subr.mxu0 0.0
  %v1632 = vand.u32 %v60, 4294901760
  %v1633 = vsub.f32 %v60, %v1632
  %v1634 = vand.u32 %v1633, 4294901760
  %1635 = vmatpush1.msra.mxu0 %v1634
  %1636 = vmatprep.subr.mxu0 0.0
  %v1637 = vand.u32 %v75, 4294901760
  %v1638 = vsub.f32 %v75, %v1637
  %v1639 = vand.u32 %v1638, 4294901760
  %1640 = vmatpush1.msra.mxu0 %v1639
  %1641 = vmatprep.subr.mxu0 0.0
  %v1642 = vand.u32 %v90, 4294901760
  %v1643 = vsub.f32 %v90, %v1642
  %v1644 = vand.u32 %v1643, 4294901760
  %1645 = vmatpush1.msra.mxu0 %v1644
  %1646 = vmatprep.subr.mxu0 0.0
  %v1647 = vand.u32 %v105, 4294901760
  %v1648 = vsub.f32 %v105, %v1647
  %v1649 = vand.u32 %v1648, 4294901760
  %1650 = vmatpush1.msra.mxu0 %v1649
  %1651 = vmatprep.subr.mxu0 0.0
  %v1652 = vand.u32 %v120, 4294901760
  %v1653 = vsub.f32 %v120, %v1652
  %v1654 = vand.u32 %v1653, 4294901760
  %1655 = vmatpush1.msra.mxu0 %v1654
  %1656 = vmatprep.subr.mxu0 0.0
  %v1657 = vand.u32 %v135, 4294901760
  %v1658 = vsub.f32 %v135, %v1657
  %v1659 = vand.u32 %v1658, 4294901760
  %1660 = vmatpush1.msra.mxu0 %v1659
  %1661 = vmatprep.subr.mxu0 0.0
  %v1662 = vand.u32 %v150, 4294901760
  %v1663 = vsub.f32 %v150, %v1662
  %v1664 = vand.u32 %v1663, 4294901760
  %1665 = vmatpush1.msra.mxu0 %v1664
  %1666 = vmatprep.subr.mxu0 0.0
  %v1667 = vand.u32 %v165, 4294901760
  %v1668 = vsub.f32 %v165, %v1667
  %v1669 = vand.u32 %v1668, 4294901760
  %1670 = vmatpush1.msra.mxu0 %v1669
  %1671 = vmatprep.subr.mxu0 0.0
  %v1672 = vand.u32 %v180, 4294901760
  %v1673 = vsub.f32 %v180, %v1672
  %v1674 = vand.u32 %v1673, 4294901760
  %1675 = vmatpush1.msra.mxu0 %v1674
  %1676 = vmatprep.subr.mxu0 0.0
  %v1677 = vand.u32 %v195, 4294901760
  %v1678 = vsub.f32 %v195, %v1677
  %v1679 = vand.u32 %v1678, 4294901760
  %1680 = vmatpush1.msra.mxu0 %v1679
  %1681 = vmatprep.subr.mxu0 0.0
  %v1682 = vand.u32 %v210, 4294901760
  %v1683 = vsub.f32 %v210, %v1682
  %v1684 = vand.u32 %v1683, 4294901760
  %1685 = vmatpush1.msra.mxu0 %v1684
  %1686 = vmatprep.subr.mxu0 0.0
  %v1687 = vand.u32 %v225, 4294901760
  %v1688 = vsub.f32 %v225, %v1687
  %v1689 = vand.u32 %v1688, 4294901760
  %1690 = vmatpush1.msra.mxu0 %v1689
  %1691 = vmatprep.subr.mxu0 0.0
  %v1692 = vand.u32 %v240, 4294901760
  %v1693 = vsub.f32 %v240, %v1692
  %v1694 = vand.u32 %v1693, 4294901760
  %1695 = vmatpush1.msra.mxu0 %v1694
  %1696 = vmatprep.subr.mxu0 0.0
  %1697 = vmatpush1.msra.mxu0 0.0
  %1698 = vmatprep.subr.mxu0 0.0
  %1699 = vmatpush1.msra.mxu0 0.0
  %1700 = vmatprep.subr.mxu0 0.0
  %1701 = vmatpush1.msra.mxu0 0.0
  %1702 = vmatprep.subr.mxu0 0.0
  %1703 = vmatpush1.msra.mxu0 0.0
  %1704 = vmatprep.subr.mxu0 0.0
  %1705 = vmatpush1.msra.mxu0 0.0
  %1706 = vmatprep.subr.mxu0 0.0
  %1707 = vmatpush1.msra.mxu0 0.0
  %1708 = vmatprep.subr.mxu0 0.0
  %1709 = vmatpush1.msra.mxu0 0.0
  %1710 = vmatprep.subr.mxu0 0.0
  %1711 = vmatpush1.msra.mxu0 0.0
  %1712 = vmatprep.subr.mxu0 0.0
  %1713 = vmatpush1.msra.mxu0 0.0
  %1714 = vmatprep.subr.mxu0 0.0
  %1715 = vmatpush1.msra.mxu0 0.0
  %1716 = vmatprep.subr.mxu0 0.0
  %1717 = vmatpush1.msra.mxu0 0.0
  %1718 = vmatprep.subr.mxu0 0.0
  %1719 = vmatpush1.msra.mxu0 0.0
  %1720 = vmatprep.subr.mxu0 0.0
  %1721 = vmatpush1.msra.mxu0 0.0
  %1722 = vmatprep.subr.mxu0 0.0
  %1723 = vmatpush1.msra.mxu0 0.0
  %1724 = vmatprep.subr.mxu0 0.0
  %1725 = vmatpush1.msra.mxu0 0.0
  %1726 = vmatprep.subr.mxu0 0.0
  %1727 = vmatpush1.msra.mxu0 0.0
  %1728 = vmatprep.mubr.f32.mxu0 0.0
  %v1729 = vand.u32 %v244, 4294901760
  %1730 = vmatmul.mubr.f32.gmra.mrb[0].mxu0 %v1729
  %v1731 = vpop.f32.mrb[0].mxu0
  %v1732 = vadd.f32 %v1605, %v1731
  %v1733 = vpop.f32.mrb[0].mxu0
  %1734 = vmatprep.mubr.f32.mxu0 0.0
  %v1735 = vand.u32 %v245, 4294901760
  %1736 = vmatmul.mubr.f32.gmra.mrb[0].mxu0 %v1735
  %v1737 = vpop.f32.mrb[0].mxu0
  %v1738 = vadd.f32 %v1613, %v1737
  %v1739 = vpop.f32.mrb[0].mxu0
  %1740 = vdwg.mxu0
  %1741 = vmatprep.subr.mxu0 0.0
  %v1742 = vand.u32 %v13, 4294901760
  %1743 = vmatpush1.msra.mxu0 %v1742
  %1744 = vmatprep.subr.mxu0 0.0
  %v1745 = vand.u32 %v30, 4294901760
  %1746 = vmatpush1.msra.mxu0 %v1745
  %1747 = vmatprep.subr.mxu0 0.0
  %v1748 = vand.u32 %v45, 4294901760
  %1749 = vmatpush1.msra.mxu0 %v1748
  %1750 = vmatprep.subr.mxu0 0.0
  %v1751 = vand.u32 %v60, 4294901760
  %1752 = vmatpush1.msra.mxu0 %v1751
  %1753 = vmatprep.subr.mxu0 0.0
  %v1754 = vand.u32 %v75, 4294901760
  %1755 = vmatpush1.msra.mxu0 %v1754
  %1756 = vmatprep.subr.mxu0 0.0
  %v1757 = vand.u32 %v90, 4294901760
  %1758 = vmatpush1.msra.mxu0 %v1757
  %1759 = vmatprep.subr.mxu0 0.0
  %v1760 = vand.u32 %v105, 4294901760
  %1761 = vmatpush1.msra.mxu0 %v1760
  %1762 = vmatprep.subr.mxu0 0.0
  %v1763 = vand.u32 %v120, 4294901760
  %1764 = vmatpush1.msra.mxu0 %v1763
  %1765 = vmatprep.subr.mxu0 0.0
  %v1766 = vand.u32 %v135, 4294901760
  %1767 = vmatpush1.msra.mxu0 %v1766
  %1768 = vmatprep.subr.mxu0 0.0
  %v1769 = vand.u32 %v150, 4294901760
  %1770 = vmatpush1.msra.mxu0 %v1769
  %1771 = vmatprep.subr.mxu0 0.0
  %v1772 = vand.u32 %v165, 4294901760
  %1773 = vmatpush1.msra.mxu0 %v1772
  %1774 = vmatprep.subr.mxu0 0.0
  %v1775 = vand.u32 %v180, 4294901760
  %1776 = vmatpush1.msra.mxu0 %v1775
  %1777 = vmatprep.subr.mxu0 0.0
  %v1778 = vand.u32 %v195, 4294901760
  %1779 = vmatpush1.msra.mxu0 %v1778
  %1780 = vmatprep.subr.mxu0 0.0
  %v1781 = vand.u32 %v210, 4294901760
  %1782 = vmatpush1.msra.mxu0 %v1781
  %1783 = vmatprep.subr.mxu0 0.0
  %v1784 = vand.u32 %v225, 4294901760
  %1785 = vmatpush1.msra.mxu0 %v1784
  %1786 = vmatprep.subr.mxu0 0.0
  %v1787 = vand.u32 %v240, 4294901760
  %1788 = vmatpush1.msra.mxu0 %v1787
  %1789 = vmatprep.subr.mxu0 0.0
  %1790 = vmatpush1.msra.mxu0 0.0
  %1791 = vmatprep.subr.mxu0 0.0
  %1792 = vmatpush1.msra.mxu0 0.0
  %1793 = vmatprep.subr.mxu0 0.0
  %1794 = vmatpush1.msra.mxu0 0.0
  %1795 = vmatprep.subr.mxu0 0.0
  %1796 = vmatpush1.msra.mxu0 0.0
  %1797 = vmatprep.subr.mxu0 0.0
  %1798 = vmatpush1.msra.mxu0 0.0
  %1799 = vmatprep.subr.mxu0 0.0
  %1800 = vmatpush1.msra.mxu0 0.0
  %1801 = vmatprep.subr.mxu0 0.0
  %1802 = vmatpush1.msra.mxu0 0.0
  %1803 = vmatprep.subr.mxu0 0.0
  %1804 = vmatpush1.msra.mxu0 0.0
  %1805 = vmatprep.subr.mxu0 0.0
  %1806 = vmatpush1.msra.mxu0 0.0
  %1807 = vmatprep.subr.mxu0 0.0
  %1808 = vmatpush1.msra.mxu0 0.0
  %1809 = vmatprep.subr.mxu0 0.0
  %1810 = vmatpush1.msra.mxu0 0.0
  %1811 = vmatprep.subr.mxu0 0.0
  %1812 = vmatpush1.msra.mxu0 0.0
  %1813 = vmatprep.subr.mxu0 0.0
  %1814 = vmatpush1.msra.mxu0 0.0
  %1815 = vmatprep.subr.mxu0 0.0
  %1816 = vmatpush1.msra.mxu0 0.0
  %1817 = vmatprep.subr.mxu0 0.0
  %1818 = vmatpush1.msra.mxu0 0.0
  %1819 = vmatprep.subr.mxu0 0.0
  %1820 = vmatpush1.msra.mxu0 0.0
  %1821 = vmatprep.mubr.f32.mxu0 0.0
  %v1822 = vand.u32 %v244, 4294901760
  %1823 = vmatmul.mubr.f32.gmra.mrb[0].mxu0 %v1822
  %v1824 = vpop.f32.mrb[0].mxu0
  %v1825 = vadd.f32 %v1732, %v1824
  %v1826 = vpop.f32.mrb[0].mxu0
  %1827 = vmatprep.mubr.f32.mxu0 0.0
  %v1828 = vand.u32 %v245, 4294901760
  %1829 = vmatmul.mubr.f32.gmra.mrb[0].mxu0 %v1828
  %v1830 = vpop.f32.mrb[0].mxu0
  %v1831 = vadd.f32 %v1738, %v1830
  %v1832 = vpop.f32.mrb[0].mxu0
  %1833 = vdwg.mxu0
  %vm1834 = vcmp.gt.f32.partialorder %v1139, 0.0
  %vm1835 = vcmp.gt.f32.partialorder %v1141, 0.0
  %vm1836 = vcmp.gt.f32.partialorder %v1825, 0.0
  %vm1837 = vcmp.gt.f32.partialorder %v1146, 0.0
  %vm1838 = vcmp.gt.f32.partialorder %v1148, 0.0
  %vm1839 = vcmp.gt.f32.partialorder %v1831, 0.0
  %v1840 = vmul.f32 %v1139, -3.2710059
  %v1841 = vmul.f32 %v1141, -3.2710059
  %v1842 = vmul.f32 %v1825, -3.2710059
  %v1843 = vmul.f32 %v1146, -3.2710059
  %v1844 = vmul.f32 %v1148, -3.2710059
  %v1845 = vmul.f32 %v1831, -3.2710059
  %v1846 = vsel %vm1834, %v1139, %v1840
  %v1847 = vsel %vm1835, %v1141, %v1841
  %v1848 = vsel %vm1836, %v1825, %v1842
  %v1849 = vsel %vm1837, %v1146, %v1843
  %v1850 = vsel %vm1838, %v1148, %v1844
  %v1851 = vsel %vm1839, %v1831, %v1845
  %1852 = vst [vmem:[%s2] sm:$0xff] %v1846
  %1853 = vst [vmem:[%s2 + $0x8] sm:$0xff] %v1847
  %1854 = vst [vmem:[%s2 + $0x10] sm:$0xff] %v1848
  %1855 = vst [vmem:[%s2 + $0x18] sm:$0xff] %v1849
  %1856 = vst [vmem:[%s2 + $0x20] sm:$0xff] %v1850
  %1857 = vst [vmem:[%s2 + $0x28] sm:$0xff] %v1851
  // Predicated region
  $region10: #{conv_transpose_leaky.1} parent=0 // pred_check
    _
  $region11: #{conv_transpose_leaky.1} parent=0 // pred_check_branch
    %1859 = sbr.rel (0) target = $region13
  $region12: #{conv_transpose_leaky.1} parent=0 // pred_region
    _
  $region13: #{conv_transpose_leaky.1} parent=0 // pred_fallthru
    _
  // Predicated region
  $region14: #{conv_transpose_leaky.1} parent=0 // pred_check
    _
  $region15: #{conv_transpose_leaky.1} parent=0 // pred_check_branch
    %1861 = sbr.rel (0) target = $region17
  $region16: #{conv_transpose_leaky.1} parent=0 // pred_region
    _
  $region17: #{conv_transpose_leaky.1} parent=0 // pred_fallthru
    _

</llo_original>
